<compile_context>
chip_gen: v7x
topology: tpu7x:2x2x1
jax: 0.10.0
libtpu: 0.0.40
codegen_flags: <defaults>
</compile_context>

<pallas_src>
import functools
import math

import jax
import jax.numpy as jnp
from jax.experimental import pallas as pl
from jax.experimental.pallas import tpu as pltpu

NEG_INF = -1e30          # out-of-window positions -> softmax prob exactly 0 (exp underflow)
KEY_MASK_BIAS = -1e4     # masked keys -> matches the module's -10000.0


# ----------------------------- stage 1: q/k/v projections -----------------------------
def _proj_kernel(
    x_ref, m_ref,
    wq_dw_ref, wk_dw_ref, wv_dw_ref,
    lnq_w_ref, lnq_b_ref, lnk_w_ref, lnk_b_ref, lnv_w_ref, lnv_b_ref,
    wq_ref, bq_ref, wk_ref, bk_ref, wv_ref, bv_ref,
    q_out_ref, k_out_ref, v_out_ref,
    *, pad, eps,
):
    T = x_ref.shape[1]
    C = x_ref.shape[2]
    x = x_ref[0]          # (T, C) f32
    m = m_ref[0]          # (T, 1) f32 {0,1}

    # Depthwise conv1d taps (k=3, pad=1).
    # TODO(synk): pltpu.roll(x, +/-1, axis=0) + edge zeroing would avoid these two (T, C)
    #             copies; kept as concatenate so the tap direction stays unambiguous.
    zrow = jnp.zeros((1, C), dtype=x.dtype)
    x_prev = jnp.concatenate([zrow, x[:-1, :]], axis=0)
    x_next = jnp.concatenate([x[1:, :], zrow], axis=0)

    def branch(dw_ref, lnw_ref, lnb_ref, w_ref, b_ref):
        dw = dw_ref[...]                                                   # (3, C)
        y = (x_prev * dw[0:1, :] + x * dw[1:2, :] + x_next * dw[2:3, :]) * m
        mu = jnp.mean(y, axis=1, keepdims=True)                            # LN over channels
        r = y - mu
        var = jnp.mean(r * r, axis=1, keepdims=True)
        z = r * jax.lax.rsqrt(var + eps) * lnw_ref[...] + lnb_ref[...]
        # 1x1 conv == channel matmul; MXU operands in w_ref.dtype (bf16), f32 accumulate.
        return jnp.dot(z.astype(w_ref.dtype), w_ref[...],
                       preferred_element_type=jnp.float32) + b_ref[...]

    q = branch(wq_dw_ref, lnq_w_ref, lnq_b_ref, wq_ref, bq_ref)            # scale pre-folded
    q_out_ref[0] = q.astype(q_out_ref.dtype)

    zpad = jnp.zeros((pad, C), dtype=k_out_ref.dtype)

    k = branch(wk_dw_ref, lnk_w_ref, lnk_b_ref, wk_ref, bk_ref)
    k_out_ref[0, 0:pad, :] = zpad
    k_out_ref[0, pad:pad + T, :] = k.astype(k_out_ref.dtype)
    k_out_ref[0, pad + T:pad + T + pad, :] = zpad

    v = branch(wv_dw_ref, lnv_w_ref, lnv_b_ref, wv_ref, bv_ref)
    v_out_ref[0, 0:pad, :] = zpad
    v_out_ref[0, pad:pad + T, :] = v.astype(v_out_ref.dtype)
    v_out_ref[0, pad + T:pad + T + pad, :] = zpad


# ------------------- stage 2: chunked sliding-window attention + proj -------------------
def _attn_kernel(
    q_ref, k0_ref, k1_ref, k2_ref, v0_ref, v1_ref, v2_ref,
    mq_ref, band_ref, kbias_ref, wp_ref, bp_ref,
    out_ref, acc_ref, *, n_head,
):
    Tq = q_ref.shape[1]
    C = q_ref.shape[2]
    hd = C // n_head

    q = q_ref[0]                                                            # (Tq, C)
    kband = jnp.concatenate([k0_ref[0], k1_ref[0], k2_ref[0]], axis=0)      # (3Tq, C)
    vband = jnp.concatenate([v0_ref[0], v1_ref[0], v2_ref[0]], axis=0)      # (3Tq, C)
    mq = mq_ref[0]                                                          # (Tq, 1) f32
    # Head-invariant additive bias: 0 in-window, NEG_INF out-of-window, -1e4 masked keys.
    bias = band_ref[...] + kbias_ref[0, 0]                                  # (Tq, 3Tq) f32

    for h in range(n_head):
        sl = slice(h * hd, (h + 1) * hd)
        s = jax.lax.dot_general(q[:, sl], kband[:, sl], (((1,), (1,)), ((), ())),
                                preferred_element_type=jnp.float32)         # (Tq, 3Tq)
        s = s + bias
        s_max = jnp.max(s, axis=1, keepdims=True)
        p = jnp.exp(s - s_max)
        p = p * pl.reciprocal(jnp.sum(p, axis=1, keepdims=True), approx=True)
        p = p * mq                                  # zero attention rows of masked queries
        acc_ref[:, sl] = jnp.dot(p.astype(vband.dtype), vband[:, sl],
                                 preferred_element_type=jnp.float32)

    o = acc_ref[...]                                                        # (Tq, C) f32
    y = jnp.dot(o.astype(wp_ref.dtype), wp_ref[...],
                preferred_element_type=jnp.float32) + bp_ref[...]
    out_ref[0] = (y * mq).astype(out_ref.dtype)


# ------------------------------------ wrapper ------------------------------------
def _choose_query_tile(T, w):
    """Query tile: divides T, multiple of 8, >= half-window so the 3*Tq key band covers
    [t-w, t+w].  Prefer 256 multiples (v6e/v7x 256x256 MXU), then 128 (v5e)."""
    if T <= 512:
        return T
    for cand in (256, 512, 128, 384):
        if cand >= w and T % cand == 0:
            return cand
    for cand in range(512, 7, -8):           # fallback: any multiple-of-8 divisor
        if cand >= w and T % cand == 0:
            return cand
    return T


def _vmem_limit_bytes():
    # Raise scoped VMEM toward physical capacity, derived from the chip so that v7x
    # (64 MiB physical) is not over-subscribed while v5e/v6e (128 MiB) get larger tiles.
    try:
        cap = pltpu.get_tpu_info().vmem_capacity_bytes
    except Exception:
        cap = 64 * 1024 * 1024
    return int(min(0.7 * cap, 100 * 1024 * 1024))


def local_masked_mhca(x, mask, params, *, n_head, window_size, mxu_dtype=jnp.bfloat16):
    """x: (B, C, T) float32, mask: (B, 1, T) bool (PyTorch conventions).

    Returns (out, qx_mask): out (B, C, T) float32, qx_mask (B, 1, T) bool.
    """
    B, C, T = x.shape
    w = window_size // 2
    assert window_size > 1 and C % n_head == 0 and T % (2 * w) == 0
    assert T % 8 == 0, "T must be a multiple of 8 (sublane alignment) for the tiled kernel"

    Tq = _choose_query_tile(T, w)
    n_j = T // Tq
    Tpad = T + 2 * Tq
    eps = 1e-5
    scale = 1.0 / math.sqrt(C // n_head)

    # NCT -> NTC (channels on the 128-lane axis).
    # TODO(synk): if the surrounding model carries (B, T, C) activations these two
    #             transposes (full extra HBM passes) can be dropped.
    x_tc = jnp.transpose(x, (0, 2, 1)).astype(jnp.float32)        # (B, T, C)
    m_col = jnp.transpose(mask.astype(jnp.float32), (0, 2, 1))    # (B, T, 1)

    f32 = lambda a: jnp.asarray(a, jnp.float32)
    # Fold 1/sqrt(head_dim) into the query projection (one-time weight rewrite).
    proj_weights = [
        f32(params["wq_dw"]), f32(params["wk_dw"]), f32(params["wv_dw"]),
        f32(params["lnq_w"]), f32(params["lnq_b"]),
        f32(params["lnk_w"]), f32(params["lnk_b"]),
        f32(params["lnv_w"]), f32(params["lnv_b"]),
        (f32(params["wq"]) * scale).astype(mxu_dtype), f32(params["bq"]) * scale,
        f32(params["wk"]).astype(mxu_dtype), f32(params["bk"]),
        f32(params["wv"]).astype(mxu_dtype), f32(params["bv"]),
    ]
    wp = f32(params["wp"]).astype(mxu_dtype)
    bp = f32(params["bp"])

    vmem_limit = _vmem_limit_bytes()

    def full_spec(shape, n_grid):
        nd = len(shape)
        if n_grid == 1:
            return pl.BlockSpec(shape, lambda b, _nd=nd: (0,) * _nd)
        return pl.BlockSpec(shape, lambda b, j, _nd=nd: (0,) * _nd)

    # ---------------- stage 1: dwconv + LN + q/k/v 1x1 projections ----------------
    q, k_pad, v_pad = pl.pallas_call(
        functools.partial(_proj_kernel, pad=Tq, eps=eps),
        out_shape=(jax.ShapeDtypeStruct((B, T, C), mxu_dtype),
                   jax.ShapeDtypeStruct((B, Tpad, C), mxu_dtype),
                   jax.ShapeDtypeStruct((B, Tpad, C), mxu_dtype)),
        grid_spec=pltpu.PrefetchScalarGridSpec(
            num_scalar_prefetch=0,
            grid=(B,),
            in_specs=[pl.BlockSpec((1, T, C), lambda b: (b, 0, 0)),
                      pl.BlockSpec((1, T, 1), lambda b: (b, 0, 0))]
                     + [full_spec(wt.shape, 1) for wt in proj_weights],
            out_specs=[pl.BlockSpec((1, T, C), lambda b: (b, 0, 0)),
                       pl.BlockSpec((1, Tpad, C), lambda b: (b, 0, 0)),
                       pl.BlockSpec((1, Tpad, C), lambda b: (b, 0, 0))]),
        compiler_params=pltpu.CompilerParams(
            dimension_semantics=("parallel",), vmem_limit_bytes=vmem_limit),
    )(x_tc, m_col, *proj_weights)
    # TODO(synk): for very long T, stage 1 should also be time-tiled (1-row conv halo).

    # ---------------- stage 2: chunked sliding-window attention ----------------
    # Head- and tile-invariant in-window mask for a (Tq query) x (3*Tq key band) tile.
    t_loc = jnp.arange(Tq)[:, None]
    s_loc = jnp.arange(3 * Tq)[None, :]
    rel = s_loc - Tq - t_loc                      # key_orig_pos - query_orig_pos
    band_const = jnp.where((rel >= -w) & (rel <= w), 0.0, NEG_INF).astype(jnp.float32)

    # Per-(batch, query-tile) additive key-validity bias over the 3*Tq band (covers both
    # masked keys and the zero-padded out-of-sequence keys).
    m_key = jnp.pad(mask.astype(jnp.float32)[:, 0, :], ((0, 0), (Tq, Tq)))   # (B, Tpad)
    gidx = jnp.arange(n_j)[:, None] * Tq + jnp.arange(3 * Tq)[None, :]       # (n_j, 3Tq)
    key_bias = jnp.where(m_key[:, gidx] > 0, 0.0, KEY_MASK_BIAS)
    key_bias = key_bias[:, :, None, :].astype(jnp.float32)                   # (B, n_j, 1, 3Tq)

    def band_spec(off):
        return pl.BlockSpec((1, Tq, C), lambda b, j, _o=off: (b, j + _o, 0))

    out_tc = pl.pallas_call(
        functools.partial(_attn_kernel, n_head=n_head),
        out_shape=jax.ShapeDtypeStruct((B, T, C), jnp.float32),
        grid_spec=pltpu.PrefetchScalarGridSpec(
            num_scalar_prefetch=0,
            grid=(B, n_j),
            in_specs=[pl.BlockSpec((1, Tq, C), lambda b, j: (b, j, 0)),       # q tile
                      band_spec(0), band_spec(1), band_spec(2),               # k band
                      band_spec(0), band_spec(1), band_spec(2),               # v band
                      pl.BlockSpec((1, Tq, 1), lambda b, j: (b, j, 0)),       # query mask
                      full_spec(band_const.shape, 2),                         # in-window mask
                      pl.BlockSpec((1, 1, 1, 3 * Tq), lambda b, j: (b, j, 0, 0)),
                      full_spec(wp.shape, 2), full_spec(bp.shape, 2)],
            out_specs=pl.BlockSpec((1, Tq, C), lambda b, j: (b, j, 0)),
            scratch_shapes=[pltpu.VMEM((Tq, C), jnp.float32)]),
        compiler_params=pltpu.CompilerParams(
            dimension_semantics=("parallel", "parallel"),   # megacore-friendly (v7x)
            vmem_limit_bytes=vmem_limit),
    )(q, k_pad, k_pad, k_pad, v_pad, v_pad, v_pad, m_col, band_const, key_bias, wp, bp)

    out = jnp.transpose(out_tc, (0, 2, 1))    # back to (B, C, T)
    return out, mask                          # qx_mask == mask (stride 1)


# ----------------------------- pure-JAX (f32) reference -----------------------------
def reference_forward(x, mask, params, *, n_head, window_size):
    B, C, T = x.shape
    hd = C // n_head
    w = window_size // 2
    scale = 1.0 / math.sqrt(hd)
    m = mask.astype(jnp.float32)                 # (B, 1, T)
    xt = jnp.transpose(x, (0, 2, 1))             # (B, T, C)
    mcol = jnp.transpose(m, (0, 2, 1))           # (B, T, 1)

    def dwconv(wdw):
        xp = jnp.pad(xt, ((0, 0), (1, 1), (0, 0)))
        y = xp[:, :-2] * wdw[0] + xp[:, 1:-1] * wdw[1] + xp[:, 2:] * wdw[2]
        return y * mcol

    def ln(z, wln, bln):
        mu = jnp.mean(z, axis=-1, keepdims=True)
        r = z - mu
        sig = jnp.mean(r * r, axis=-1, keepdims=True)
        return r / jnp.sqrt(sig + 1e-5) * wln + bln

    q = ln(dwconv(params["wq_dw"]), params["lnq_w"], params["lnq_b"]) @ params["wq"] + params["bq"]
    k = ln(dwconv(params["wk_dw"]), params["lnk_w"], params["lnk_b"]) @ params["wk"] + params["bk"]
    v = ln(dwconv(params["wv_dw"]), params["lnv_w"], params["lnv_b"]) @ params["wv"] + params["bv"]
    q = q * scale

    qh = q.reshape(B, T, n_head, hd).transpose(0, 2, 1, 3)
    kh = k.reshape(B, T, n_head, hd).transpose(0, 2, 1, 3)
    vh = v.reshape(B, T, n_head, hd).transpose(0, 2, 1, 3)

    s = jnp.einsum("bhtd,bhsd->bhts", qh, kh)
    rel = jnp.arange(T)[None, :] - jnp.arange(T)[:, None]
    band = (rel >= -w) & (rel <= w)
    key_bias = jnp.where(m[:, 0] > 0, 0.0, KEY_MASK_BIAS)[:, None, None, :]
    s = s + key_bias
    s = jnp.where(band[None, None], s, NEG_INF)
    p = jax.nn.softmax(s, axis=-1)
    p = p * mcol[:, None, :, :]
    o = jnp.einsum("bhts,bhsd->bhtd", p, vh)
    o = o.transpose(0, 2, 1, 3).reshape(B, T, C)
    y = (o @ params["wp"] + params["bp"]) * mcol
    return jnp.transpose(y, (0, 2, 1))


# --------------------------------------- test ---------------------------------------
def make_params(key, C):
    ks = jax.random.split(key, 17)

    def nrm(k, shape, s=0.2):
        return (s * jax.random.normal(k, shape)).astype(jnp.float32)

    return {
        "wq_dw": nrm(ks[0], (3, C)),
        "wk_dw": nrm(ks[1], (3, C)),
        "wv_dw": nrm(ks[2], (3, C)),
        "lnq_w": (1.0 + 0.1 * jax.random.normal(ks[3], (1, C))).astype(jnp.float32),
        "lnq_b": nrm(ks[4], (1, C), 0.1),
        "lnk_w": (1.0 + 0.1 * jax.random.normal(ks[5], (1, C))).astype(jnp.float32),
        "lnk_b": nrm(ks[6], (1, C), 0.1),
        "lnv_w": (1.0 + 0.1 * jax.random.normal(ks[7], (1, C))).astype(jnp.float32),
        "lnv_b": nrm(ks[8], (1, C), 0.1),
        "wq": nrm(ks[9], (C, C)), "bq": nrm(ks[10], (1, C), 0.1),
        "wk": nrm(ks[11], (C, C)), "bk": nrm(ks[12], (1, C), 0.1),
        "wv": nrm(ks[13], (C, C)), "bv": nrm(ks[14], (1, C), 0.1),
        "wp": nrm(ks[15], (C, C)), "bp": nrm(ks[16], (1, C), 0.1),
    }


def run_case(name, key, *, B, C, T, n_head, window_size, valid_lens, f32_tol, bf16_tol):
    kp, kx = jax.random.split(key)
    params = make_params(kp, C)
    x = jax.random.normal(kx, (B, C, T), dtype=jnp.float32)
    valid = jnp.asarray(valid_lens)
    mask = jnp.arange(T)[None, None, :] < valid[:, None, None]       # (B, 1, T) bool

    ref = jax.block_until_ready(
        reference_forward(x, mask, params, n_head=n_head, window_size=window_size))

    # f32 MXU mode: tight structural/numerical check.
    out32, qm = local_masked_mhca(x, mask, params, n_head=n_head,
                                  window_size=window_size, mxu_dtype=jnp.float32)
    out32 = jax.block_until_ready(out32)
    assert out32.shape == (B, C, T) and qm.shape == (B, 1, T)
    assert bool(jnp.all(jnp.isfinite(out32)))
    err32 = float(jnp.max(jnp.abs(out32 - ref)))
    assert err32 < f32_tol, f"{name}: f32-mode max abs err {err32}"

    # bf16 MXU operands (production config): tolerance sized for bf16 operand quantization.
    outbf, _ = local_masked_mhca(x, mask, params, n_head=n_head,
                                 window_size=window_size, mxu_dtype=jnp.bfloat16)
    outbf = jax.block_until_ready(outbf)
    assert bool(jnp.all(jnp.isfinite(outbf)))
    errbf = float(jnp.max(jnp.abs(outbf - ref)))
    if bf16_tol is not None:
        assert errbf < bf16_tol, f"{name}: bf16-mode max abs err {errbf}"


if __name__ == "__main__":
    root = jax.random.PRNGKey(0)
    k1, k2 = jax.random.split(root)

    # Small single-tile case (toy module configuration; one query tile covers T).
    run_case("toy", k1, B=2, C=32, T=16, n_head=4, window_size=4,
             valid_lens=[16, 12], f32_tol=5e-2, bf16_tol=2e-1)

    # Multi-tile case: exercises the chunked sliding-window path (T // Tq = 4 query tiles,
    # banded k/v loads, padded out-of-sequence keys and a masked tail).
    run_case("tiled", k2, B=1, C=64, T=1024, n_head=4, window_size=16,
             valid_lens=[1000], f32_tol=5e-2, bf16_tol=None)

    print("KERNEL_OK")
</pallas_src>

<mosaic_0001>
module attributes {stable_mosaic.version = 11 : i64} {
  func.func @_proj_kernel(%arg0: i32, %arg1: memref<1x16x32xf32, #tpu.memory_space<vmem>>, %arg2: memref<1x16x1xf32, #tpu.memory_space<vmem>>, %arg3: memref<3x32xf32, #tpu.memory_space<vmem>>, %arg4: memref<3x32xf32, #tpu.memory_space<vmem>>, %arg5: memref<3x32xf32, #tpu.memory_space<vmem>>, %arg6: memref<1x32xf32, #tpu.memory_space<vmem>>, %arg7: memref<1x32xf32, #tpu.memory_space<vmem>>, %arg8: memref<1x32xf32, #tpu.memory_space<vmem>>, %arg9: memref<1x32xf32, #tpu.memory_space<vmem>>, %arg10: memref<1x32xf32, #tpu.memory_space<vmem>>, %arg11: memref<1x32xf32, #tpu.memory_space<vmem>>, %arg12: memref<32x32xf32, #tpu.memory_space<vmem>>, %arg13: memref<1x32xf32, #tpu.memory_space<vmem>>, %arg14: memref<32x32xf32, #tpu.memory_space<vmem>>, %arg15: memref<1x32xf32, #tpu.memory_space<vmem>>, %arg16: memref<32x32xf32, #tpu.memory_space<vmem>>, %arg17: memref<1x32xf32, #tpu.memory_space<vmem>>, %arg18: memref<1x16x32xf32, #tpu.memory_space<vmem>>, %arg19: memref<1x48x32xf32, #tpu.memory_space<vmem>>, %arg20: memref<1x48x32xf32, #tpu.memory_space<vmem>>) attributes {dimension_semantics = [#tpu.dimension_semantics<parallel>], iteration_bounds = array<i64: 2>, scalar_prefetch = 0 : i64, scratch_operands = 0 : i64, tpu.core_type = #tpu.core_type<tc>, window_params = [{transform_indices = @transform_0, window_bounds = array<i64: 1, 16, 32>}, {transform_indices = @transform_1, window_bounds = array<i64: 1, 16, 1>}, {pipeline_mode = #tpu.pipeline_mode<synchronous>, transform_indices = @transform_2, window_bounds = array<i64: 3, 32>}, {pipeline_mode = #tpu.pipeline_mode<synchronous>, transform_indices = @transform_3, window_bounds = array<i64: 3, 32>}, {pipeline_mode = #tpu.pipeline_mode<synchronous>, transform_indices = @transform_4, window_bounds = array<i64: 3, 32>}, {pipeline_mode = #tpu.pipeline_mode<synchronous>, transform_indices = @transform_5, window_bounds = array<i64: 1, 32>}, {pipeline_mode = #tpu.pipeline_mode<synchronous>, transform_indices = @transform_6, window_bounds = array<i64: 1, 32>}, {pipeline_mode = #tpu.pipeline_mode<synchronous>, transform_indices = @transform_7, window_bounds = array<i64: 1, 32>}, {pipeline_mode = #tpu.pipeline_mode<synchronous>, transform_indices = @transform_8, window_bounds = array<i64: 1, 32>}, {pipeline_mode = #tpu.pipeline_mode<synchronous>, transform_indices = @transform_9, window_bounds = array<i64: 1, 32>}, {pipeline_mode = #tpu.pipeline_mode<synchronous>, transform_indices = @transform_10, window_bounds = array<i64: 1, 32>}, {pipeline_mode = #tpu.pipeline_mode<synchronous>, transform_indices = @transform_11, window_bounds = array<i64: 32, 32>}, {pipeline_mode = #tpu.pipeline_mode<synchronous>, transform_indices = @transform_12, window_bounds = array<i64: 1, 32>}, {pipeline_mode = #tpu.pipeline_mode<synchronous>, transform_indices = @transform_13, window_bounds = array<i64: 32, 32>}, {pipeline_mode = #tpu.pipeline_mode<synchronous>, transform_indices = @transform_14, window_bounds = array<i64: 1, 32>}, {pipeline_mode = #tpu.pipeline_mode<synchronous>, transform_indices = @transform_15, window_bounds = array<i64: 32, 32>}, {pipeline_mode = #tpu.pipeline_mode<synchronous>, transform_indices = @transform_16, window_bounds = array<i64: 1, 32>}, {transform_indices = @transform_17, window_bounds = array<i64: 1, 16, 32>}, {transform_indices = @transform_18, window_bounds = array<i64: 1, 48, 32>}, {transform_indices = @transform_19, window_bounds = array<i64: 1, 48, 32>}]} {
    %c0 = arith.constant 0 : index
    %c0_0 = arith.constant 0 : index
    %c0_1 = arith.constant 0 : index
    %0 = vector.load %arg1[%c0, %c0_0, %c0_1] : memref<1x16x32xf32, #tpu.memory_space<vmem>>, vector<1x16x32xf32>
    %1 = vector.shape_cast %0 : vector<1x16x32xf32> to vector<16x32xf32>
    %c0_2 = arith.constant 0 : index
    %c0_3 = arith.constant 0 : index
    %c0_4 = arith.constant 0 : index
    %2 = vector.load %arg2[%c0_2, %c0_3, %c0_4] : memref<1x16x1xf32, #tpu.memory_space<vmem>>, vector<1x16x1xf32>
    %3 = vector.shape_cast %2 : vector<1x16x1xf32> to vector<16x1xf32>
    %cst = arith.constant 0.000000e+00 : f32
    %4 = vector.broadcast %cst : f32 to vector<1x32xf32>
    %5 = vector.extract_strided_slice %1 {offsets = [0, 0], sizes = [15, 32], strides = [1, 1]} : vector<16x32xf32> to vector<15x32xf32>
    %6 = tpu.concatenate %4, %5 in 0 : vector<1x32xf32>, vector<15x32xf32> -> vector<16x32xf32>
    %7 = vector.extract_strided_slice %1 {offsets = [1, 0], sizes = [15, 32], strides = [1, 1]} : vector<16x32xf32> to vector<15x32xf32>
    %8 = tpu.concatenate %7, %4 in 0 : vector<15x32xf32>, vector<1x32xf32> -> vector<16x32xf32>
    %c0_5 = arith.constant 0 : index
    %c0_6 = arith.constant 0 : index
    %9 = vector.load %arg3[%c0_5, %c0_6] : memref<3x32xf32, #tpu.memory_space<vmem>>, vector<3x32xf32>
    %10 = vector.extract_strided_slice %9 {offsets = [0, 0], sizes = [1, 32], strides = [1, 1]} : vector<3x32xf32> to vector<1x32xf32>
    %11 = vector.broadcast %10 : vector<1x32xf32> to vector<16x32xf32>
    %12 = arith.mulf %6, %11 : vector<16x32xf32>
    %13 = vector.extract_strided_slice %9 {offsets = [1, 0], sizes = [1, 32], strides = [1, 1]} : vector<3x32xf32> to vector<1x32xf32>
    %14 = vector.broadcast %13 : vector<1x32xf32> to vector<16x32xf32>
    %15 = arith.mulf %1, %14 : vector<16x32xf32>
    %16 = arith.addf %12, %15 : vector<16x32xf32>
    %17 = vector.extract_strided_slice %9 {offsets = [2, 0], sizes = [1, 32], strides = [1, 1]} : vector<3x32xf32> to vector<1x32xf32>
    %18 = vector.broadcast %17 : vector<1x32xf32> to vector<16x32xf32>
    %19 = arith.mulf %8, %18 : vector<16x32xf32>
    %20 = arith.addf %16, %19 : vector<16x32xf32>
    %21 = vector.broadcast %3 : vector<16x1xf32> to vector<16x32xf32>
    %22 = arith.mulf %20, %21 : vector<16x32xf32>
    %cst_7 = arith.constant dense<0.000000e+00> : vector<16xf32>
    %23 = vector.multi_reduction <add>, %22, %cst_7 [1] : vector<16x32xf32> to vector<16xf32>
    %24 = vector.shape_cast %23 : vector<16xf32> to vector<16x1xf32>
    %cst_8 = arith.constant 3.200000e+01 : f32
    %25 = vector.broadcast %cst_8 : f32 to vector<16x1xf32>
    %26 = arith.divf %24, %25 : vector<16x1xf32>
    %27 = vector.broadcast %26 : vector<16x1xf32> to vector<16x32xf32>
    %28 = arith.subf %22, %27 : vector<16x32xf32>
    %29 = arith.mulf %28, %28 : vector<16x32xf32>
    %cst_9 = arith.constant dense<0.000000e+00> : vector<16xf32>
    %30 = vector.multi_reduction <add>, %29, %cst_9 [1] : vector<16x32xf32> to vector<16xf32>
    %31 = vector.shape_cast %30 : vector<16xf32> to vector<16x1xf32>
    %cst_10 = arith.constant 3.200000e+01 : f32
    %32 = vector.broadcast %cst_10 : f32 to vector<16x1xf32>
    %33 = arith.divf %31, %32 : vector<16x1xf32>
    %cst_11 = arith.constant 9.99999974E-6 : f32
    %34 = vector.broadcast %cst_11 : f32 to vector<16x1xf32>
    %35 = arith.addf %33, %34 : vector<16x1xf32>
    %36 = math.rsqrt %35 : vector<16x1xf32>
    %37 = vector.broadcast %36 : vector<16x1xf32> to vector<16x32xf32>
    %38 = arith.mulf %28, %37 : vector<16x32xf32>
    %c0_12 = arith.constant 0 : index
    %c0_13 = arith.constant 0 : index
    %39 = vector.load %arg6[%c0_12, %c0_13] : memref<1x32xf32, #tpu.memory_space<vmem>>, vector<1x32xf32>
    %40 = vector.broadcast %39 : vector<1x32xf32> to vector<16x32xf32>
    %41 = arith.mulf %38, %40 : vector<16x32xf32>
    %c0_14 = arith.constant 0 : index
    %c0_15 = arith.constant 0 : index
    %42 = vector.load %arg7[%c0_14, %c0_15] : memref<1x32xf32, #tpu.memory_space<vmem>>, vector<1x32xf32>
    %43 = vector.broadcast %42 : vector<1x32xf32> to vector<16x32xf32>
    %44 = arith.addf %41, %43 : vector<16x32xf32>
    %c0_16 = arith.constant 0 : index
    %c0_17 = arith.constant 0 : index
    %45 = vector.load %arg12[%c0_16, %c0_17] : memref<32x32xf32, #tpu.memory_space<vmem>>, vector<32x32xf32>
    %cst_18 = arith.constant dense<0.000000e+00> : vector<16x32xf32>
    %46 = tpu.matmul %44, %45, %cst_18 {dimension_numbers = #tpu.dot_dimension_numbers<[1], [0], [0], [1], [0, 0, 1, 1], [], []>} : vector<16x32xf32>, vector<32x32xf32>, vector<16x32xf32> -> vector<16x32xf32>
    %c0_19 = arith.constant 0 : index
    %c0_20 = arith.constant 0 : index
    %47 = vector.load %arg13[%c0_19, %c0_20] : memref<1x32xf32, #tpu.memory_space<vmem>>, vector<1x32xf32>
    %48 = vector.broadcast %47 : vector<1x32xf32> to vector<16x32xf32>
    %49 = arith.addf %46, %48 : vector<16x32xf32>
    %c0_21 = arith.constant 0 : index
    %c0_22 = arith.constant 0 : index
    %c0_23 = arith.constant 0 : index
    %50 = vector.load %arg18[%c0_21, %c0_22, %c0_23] : memref<1x16x32xf32, #tpu.memory_space<vmem>>, vector<1x16x32xf32>
    %51 = vector.shape_cast %50 : vector<1x16x32xf32> to vector<16x32xf32>
    %52 = vector.shape_cast %49 : vector<16x32xf32> to vector<1x16x32xf32>
    tpu.vector_store %arg18[%c0_21, %c0_22, %c0_23], %52 {strides = array<i32>} : memref<1x16x32xf32, #tpu.memory_space<vmem>>, vector<1x16x32xf32>,
    %cst_24 = arith.constant 0.000000e+00 : f32
    %53 = vector.broadcast %cst_24 : f32 to vector<16x32xf32>
    %c0_25 = arith.constant 0 : index
    %c0_26 = arith.constant 0 : index
    %54 = vector.load %arg4[%c0_25, %c0_26] : memref<3x32xf32, #tpu.memory_space<vmem>>, vector<3x32xf32>
    %55 = vector.extract_strided_slice %54 {offsets = [0, 0], sizes = [1, 32], strides = [1, 1]} : vector<3x32xf32> to vector<1x32xf32>
    %56 = vector.broadcast %55 : vector<1x32xf32> to vector<16x32xf32>
    %57 = arith.mulf %6, %56 : vector<16x32xf32>
    %58 = vector.extract_strided_slice %54 {offsets = [1, 0], sizes = [1, 32], strides = [1, 1]} : vector<3x32xf32> to vector<1x32xf32>
    %59 = vector.broadcast %58 : vector<1x32xf32> to vector<16x32xf32>
    %60 = arith.mulf %1, %59 : vector<16x32xf32>
    %61 = arith.addf %57, %60 : vector<16x32xf32>
    %62 = vector.extract_strided_slice %54 {offsets = [2, 0], sizes = [1, 32], strides = [1, 1]} : vector<3x32xf32> to vector<1x32xf32>
    %63 = vector.broadcast %62 : vector<1x32xf32> to vector<16x32xf32>
    %64 = arith.mulf %8, %63 : vector<16x32xf32>
    %65 = arith.addf %61, %64 : vector<16x32xf32>
    %66 = vector.broadcast %3 : vector<16x1xf32> to vector<16x32xf32>
    %67 = arith.mulf %65, %66 : vector<16x32xf32>
    %cst_27 = arith.constant dense<0.000000e+00> : vector<16xf32>
    %68 = vector.multi_reduction <add>, %67, %cst_27 [1] : vector<16x32xf32> to vector<16xf32>
    %69 = vector.shape_cast %68 : vector<16xf32> to vector<16x1xf32>
    %cst_28 = arith.constant 3.200000e+01 : f32
    %70 = vector.broadcast %cst_28 : f32 to vector<16x1xf32>
    %71 = arith.divf %69, %70 : vector<16x1xf32>
    %72 = vector.broadcast %71 : vector<16x1xf32> to vector<16x32xf32>
    %73 = arith.subf %67, %72 : vector<16x32xf32>
    %74 = arith.mulf %73, %73 : vector<16x32xf32>
    %cst_29 = arith.constant dense<0.000000e+00> : vector<16xf32>
    %75 = vector.multi_reduction <add>, %74, %cst_29 [1] : vector<16x32xf32> to vector<16xf32>
    %76 = vector.shape_cast %75 : vector<16xf32> to vector<16x1xf32>
    %cst_30 = arith.constant 3.200000e+01 : f32
    %77 = vector.broadcast %cst_30 : f32 to vector<16x1xf32>
    %78 = arith.divf %76, %77 : vector<16x1xf32>
    %cst_31 = arith.constant 9.99999974E-6 : f32
    %79 = vector.broadcast %cst_31 : f32 to vector<16x1xf32>
    %80 = arith.addf %78, %79 : vector<16x1xf32>
    %81 = math.rsqrt %80 : vector<16x1xf32>
    %82 = vector.broadcast %81 : vector<16x1xf32> to vector<16x32xf32>
    %83 = arith.mulf %73, %82 : vector<16x32xf32>
    %c0_32 = arith.constant 0 : index
    %c0_33 = arith.constant 0 : index
    %84 = vector.load %arg8[%c0_32, %c0_33] : memref<1x32xf32, #tpu.memory_space<vmem>>, vector<1x32xf32>
    %85 = vector.broadcast %84 : vector<1x32xf32> to vector<16x32xf32>
    %86 = arith.mulf %83, %85 : vector<16x32xf32>
    %c0_34 = arith.constant 0 : index
    %c0_35 = arith.constant 0 : index
    %87 = vector.load %arg9[%c0_34, %c0_35] : memref<1x32xf32, #tpu.memory_space<vmem>>, vector<1x32xf32>
    %88 = vector.broadcast %87 : vector<1x32xf32> to vector<16x32xf32>
    %89 = arith.addf %86, %88 : vector<16x32xf32>
    %c0_36 = arith.constant 0 : index
    %c0_37 = arith.constant 0 : index
    %90 = vector.load %arg14[%c0_36, %c0_37] : memref<32x32xf32, #tpu.memory_space<vmem>>, vector<32x32xf32>
    %cst_38 = arith.constant dense<0.000000e+00> : vector<16x32xf32>
    %91 = tpu.matmul %89, %90, %cst_38 {dimension_numbers = #tpu.dot_dimension_numbers<[1], [0], [0], [1], [0, 0, 1, 1], [], []>} : vector<16x32xf32>, vector<32x32xf32>, vector<16x32xf32> -> vector<16x32xf32>
    %c0_39 = arith.constant 0 : index
    %c0_40 = arith.constant 0 : index
    %92 = vector.load %arg15[%c0_39, %c0_40] : memref<1x32xf32, #tpu.memory_space<vmem>>, vector<1x32xf32>
    %93 = vector.broadcast %92 : vector<1x32xf32> to vector<16x32xf32>
    %94 = arith.addf %91, %93 : vector<16x32xf32>
    %c0_41 = arith.constant 0 : index
    %c0_42 = arith.constant 0 : index
    %c0_43 = arith.constant 0 : index
    %95 = vector.load %arg19[%c0_41, %c0_42, %c0_43] : memref<1x48x32xf32, #tpu.memory_space<vmem>>, vector<1x16x32xf32>
    %96 = vector.shape_cast %95 : vector<1x16x32xf32> to vector<16x32xf32>
    %97 = vector.shape_cast %53 : vector<16x32xf32> to vector<1x16x32xf32>
    tpu.vector_store %arg19[%c0_41, %c0_42, %c0_43], %97 {strides = array<i32>} : memref<1x48x32xf32, #tpu.memory_space<vmem>>, vector<1x16x32xf32>,
    %c0_44 = arith.constant 0 : index
    %c16 = arith.constant 16 : index
    %c0_45 = arith.constant 0 : index
    %98 = vector.load %arg19[%c0_44, %c16, %c0_45] : memref<1x48x32xf32, #tpu.memory_space<vmem>>, vector<1x16x32xf32>
    %99 = vector.shape_cast %98 : vector<1x16x32xf32> to vector<16x32xf32>
    %100 = vector.shape_cast %94 : vector<16x32xf32> to vector<1x16x32xf32>
    tpu.vector_store %arg19[%c0_44, %c16, %c0_45], %100 {strides = array<i32>} : memref<1x48x32xf32, #tpu.memory_space<vmem>>, vector<1x16x32xf32>,
    %c0_46 = arith.constant 0 : index
    %c32 = arith.constant 32 : index
    %c0_47 = arith.constant 0 : index
    %101 = vector.load %arg19[%c0_46, %c32, %c0_47] : memref<1x48x32xf32, #tpu.memory_space<vmem>>, vector<1x16x32xf32>
    %102 = vector.shape_cast %101 : vector<1x16x32xf32> to vector<16x32xf32>
    %103 = vector.shape_cast %53 : vector<16x32xf32> to vector<1x16x32xf32>
    tpu.vector_store %arg19[%c0_46, %c32, %c0_47], %103 {strides = array<i32>} : memref<1x48x32xf32, #tpu.memory_space<vmem>>, vector<1x16x32xf32>,
    %c0_48 = arith.constant 0 : index
    %c0_49 = arith.constant 0 : index
    %104 = vector.load %arg5[%c0_48, %c0_49] : memref<3x32xf32, #tpu.memory_space<vmem>>, vector<3x32xf32>
    %105 = vector.extract_strided_slice %104 {offsets = [0, 0], sizes = [1, 32], strides = [1, 1]} : vector<3x32xf32> to vector<1x32xf32>
    %106 = vector.broadcast %105 : vector<1x32xf32> to vector<16x32xf32>
    %107 = arith.mulf %6, %106 : vector<16x32xf32>
    %108 = vector.extract_strided_slice %104 {offsets = [1, 0], sizes = [1, 32], strides = [1, 1]} : vector<3x32xf32> to vector<1x32xf32>
    %109 = vector.broadcast %108 : vector<1x32xf32> to vector<16x32xf32>
    %110 = arith.mulf %1, %109 : vector<16x32xf32>
    %111 = arith.addf %107, %110 : vector<16x32xf32>
    %112 = vector.extract_strided_slice %104 {offsets = [2, 0], sizes = [1, 32], strides = [1, 1]} : vector<3x32xf32> to vector<1x32xf32>
    %113 = vector.broadcast %112 : vector<1x32xf32> to vector<16x32xf32>
    %114 = arith.mulf %8, %113 : vector<16x32xf32>
    %115 = arith.addf %111, %114 : vector<16x32xf32>
    %116 = vector.broadcast %3 : vector<16x1xf32> to vector<16x32xf32>
    %117 = arith.mulf %115, %116 : vector<16x32xf32>
    %cst_50 = arith.constant dense<0.000000e+00> : vector<16xf32>
    %118 = vector.multi_reduction <add>, %117, %cst_50 [1] : vector<16x32xf32> to vector<16xf32>
    %119 = vector.shape_cast %118 : vector<16xf32> to vector<16x1xf32>
    %cst_51 = arith.constant 3.200000e+01 : f32
    %120 = vector.broadcast %cst_51 : f32 to vector<16x1xf32>
    %121 = arith.divf %119, %120 : vector<16x1xf32>
    %122 = vector.broadcast %121 : vector<16x1xf32> to vector<16x32xf32>
    %123 = arith.subf %117, %122 : vector<16x32xf32>
    %124 = arith.mulf %123, %123 : vector<16x32xf32>
    %cst_52 = arith.constant dense<0.000000e+00> : vector<16xf32>
    %125 = vector.multi_reduction <add>, %124, %cst_52 [1] : vector<16x32xf32> to vector<16xf32>
    %126 = vector.shape_cast %125 : vector<16xf32> to vector<16x1xf32>
    %cst_53 = arith.constant 3.200000e+01 : f32
    %127 = vector.broadcast %cst_53 : f32 to vector<16x1xf32>
    %128 = arith.divf %126, %127 : vector<16x1xf32>
    %cst_54 = arith.constant 9.99999974E-6 : f32
    %129 = vector.broadcast %cst_54 : f32 to vector<16x1xf32>
    %130 = arith.addf %128, %129 : vector<16x1xf32>
    %131 = math.rsqrt %130 : vector<16x1xf32>
    %132 = vector.broadcast %131 : vector<16x1xf32> to vector<16x32xf32>
    %133 = arith.mulf %123, %132 : vector<16x32xf32>
    %c0_55 = arith.constant 0 : index
    %c0_56 = arith.constant 0 : index
    %134 = vector.load %arg10[%c0_55, %c0_56] : memref<1x32xf32, #tpu.memory_space<vmem>>, vector<1x32xf32>
    %135 = vector.broadcast %134 : vector<1x32xf32> to vector<16x32xf32>
    %136 = arith.mulf %133, %135 : vector<16x32xf32>
    %c0_57 = arith.constant 0 : index
    %c0_58 = arith.constant 0 : index
    %137 = vector.load %arg11[%c0_57, %c0_58] : memref<1x32xf32, #tpu.memory_space<vmem>>, vector<1x32xf32>
    %138 = vector.broadcast %137 : vector<1x32xf32> to vector<16x32xf32>
    %139 = arith.addf %136, %138 : vector<16x32xf32>
    %c0_59 = arith.constant 0 : index
    %c0_60 = arith.constant 0 : index
    %140 = vector.load %arg16[%c0_59, %c0_60] : memref<32x32xf32, #tpu.memory_space<vmem>>, vector<32x32xf32>
    %cst_61 = arith.constant dense<0.000000e+00> : vector<16x32xf32>
    %141 = tpu.matmul %139, %140, %cst_61 {dimension_numbers = #tpu.dot_dimension_numbers<[1], [0], [0], [1], [0, 0, 1, 1], [], []>} : vector<16x32xf32>, vector<32x32xf32>, vector<16x32xf32> -> vector<16x32xf32>
    %c0_62 = arith.constant 0 : index
    %c0_63 = arith.constant 0 : index
    %142 = vector.load %arg17[%c0_62, %c0_63] : memref<1x32xf32, #tpu.memory_space<vmem>>, vector<1x32xf32>
    %143 = vector.broadcast %142 : vector<1x32xf32> to vector<16x32xf32>
    %144 = arith.addf %141, %143 : vector<16x32xf32>
    %c0_64 = arith.constant 0 : index
    %c0_65 = arith.constant 0 : index
    %c0_66 = arith.constant 0 : index
    %145 = vector.load %arg20[%c0_64, %c0_65, %c0_66] : memref<1x48x32xf32, #tpu.memory_space<vmem>>, vector<1x16x32xf32>
    %146 = vector.shape_cast %145 : vector<1x16x32xf32> to vector<16x32xf32>
    %147 = vector.shape_cast %53 : vector<16x32xf32> to vector<1x16x32xf32>
    tpu.vector_store %arg20[%c0_64, %c0_65, %c0_66], %147 {strides = array<i32>} : memref<1x48x32xf32, #tpu.memory_space<vmem>>, vector<1x16x32xf32>,
    %c0_67 = arith.constant 0 : index
    %c16_68 = arith.constant 16 : index
    %c0_69 = arith.constant 0 : index
    %148 = vector.load %arg20[%c0_67, %c16_68, %c0_69] : memref<1x48x32xf32, #tpu.memory_space<vmem>>, vector<1x16x32xf32>
    %149 = vector.shape_cast %148 : vector<1x16x32xf32> to vector<16x32xf32>
    %150 = vector.shape_cast %144 : vector<16x32xf32> to vector<1x16x32xf32>
    tpu.vector_store %arg20[%c0_67, %c16_68, %c0_69], %150 {strides = array<i32>} : memref<1x48x32xf32, #tpu.memory_space<vmem>>, vector<1x16x32xf32>,
    %c0_70 = arith.constant 0 : index
    %c32_71 = arith.constant 32 : index
    %c0_72 = arith.constant 0 : index
    %151 = vector.load %arg20[%c0_70, %c32_71, %c0_72] : memref<1x48x32xf32, #tpu.memory_space<vmem>>, vector<1x16x32xf32>
    %152 = vector.shape_cast %151 : vector<1x16x32xf32> to vector<16x32xf32>
    %153 = vector.shape_cast %53 : vector<16x32xf32> to vector<1x16x32xf32>
    tpu.vector_store %arg20[%c0_70, %c32_71, %c0_72], %153 {strides = array<i32>} : memref<1x48x32xf32, #tpu.memory_space<vmem>>, vector<1x16x32xf32>,
    return
  }
  func.func @transform_0(%arg0: i32) -> (i32, i32, i32) {
    %c0_i32 = arith.constant 0 : i32
    %c0_i32_0 = arith.constant 0 : i32
    %c0_i32_1 = arith.constant 0 : i32
    return %arg0, %c0_i32, %c0_i32_0 : i32, i32, i32
  }
  func.func @transform_1(%arg0: i32) -> (i32, i32, i32) {
    %c0_i32 = arith.constant 0 : i32
    %c0_i32_0 = arith.constant 0 : i32
    %c0_i32_1 = arith.constant 0 : i32
    return %arg0, %c0_i32, %c0_i32_0 : i32, i32, i32
  }
  func.func @transform_2(%arg0: i32) -> (i32, i32) {
    %c0_i32 = arith.constant 0 : i32
    %c0_i32_0 = arith.constant 0 : i32
    %c0_i32_1 = arith.constant 0 : i32
    return %c0_i32, %c0_i32_0 : i32, i32
  }
  func.func @transform_3(%arg0: i32) -> (i32, i32) {
    %c0_i32 = arith.constant 0 : i32
    %c0_i32_0 = arith.constant 0 : i32
    %c0_i32_1 = arith.constant 0 : i32
    return %c0_i32, %c0_i32_0 : i32, i32
  }
  func.func @transform_4(%arg0: i32) -> (i32, i32) {
    %c0_i32 = arith.constant 0 : i32
    %c0_i32_0 = arith.constant 0 : i32
    %c0_i32_1 = arith.constant 0 : i32
    return %c0_i32, %c0_i32_0 : i32, i32
  }
  func.func @transform_5(%arg0: i32) -> (i32, i32) {
    %c0_i32 = arith.constant 0 : i32
    %c0_i32_0 = arith.constant 0 : i32
    %c0_i32_1 = arith.constant 0 : i32
    return %c0_i32, %c0_i32_0 : i32, i32
  }
  func.func @transform_6(%arg0: i32) -> (i32, i32) {
    %c0_i32 = arith.constant 0 : i32
    %c0_i32_0 = arith.constant 0 : i32
    %c0_i32_1 = arith.constant 0 : i32
    return %c0_i32, %c0_i32_0 : i32, i32
  }
  func.func @transform_7(%arg0: i32) -> (i32, i32) {
    %c0_i32 = arith.constant 0 : i32
    %c0_i32_0 = arith.constant 0 : i32
    %c0_i32_1 = arith.constant 0 : i32
    return %c0_i32, %c0_i32_0 : i32, i32
  }
  func.func @transform_8(%arg0: i32) -> (i32, i32) {
    %c0_i32 = arith.constant 0 : i32
    %c0_i32_0 = arith.constant 0 : i32
    %c0_i32_1 = arith.constant 0 : i32
    return %c0_i32, %c0_i32_0 : i32, i32
  }
  func.func @transform_9(%arg0: i32) -> (i32, i32) {
    %c0_i32 = arith.constant 0 : i32
    %c0_i32_0 = arith.constant 0 : i32
    %c0_i32_1 = arith.constant 0 : i32
    return %c0_i32, %c0_i32_0 : i32, i32
  }
  func.func @transform_10(%arg0: i32) -> (i32, i32) {
    %c0_i32 = arith.constant 0 : i32
    %c0_i32_0 = arith.constant 0 : i32
    %c0_i32_1 = arith.constant 0 : i32
    return %c0_i32, %c0_i32_0 : i32, i32
  }
  func.func @transform_11(%arg0: i32) -> (i32, i32) {
    %c0_i32 = arith.constant 0 : i32
    %c0_i32_0 = arith.constant 0 : i32
    %c0_i32_1 = arith.constant 0 : i32
    return %c0_i32, %c0_i32_0 : i32, i32
  }
  func.func @transform_12(%arg0: i32) -> (i32, i32) {
    %c0_i32 = arith.constant 0 : i32
    %c0_i32_0 = arith.constant 0 : i32
    %c0_i32_1 = arith.constant 0 : i32
    return %c0_i32, %c0_i32_0 : i32, i32
  }
  func.func @transform_13(%arg0: i32) -> (i32, i32) {
    %c0_i32 = arith.constant 0 : i32
    %c0_i32_0 = arith.constant 0 : i32
    %c0_i32_1 = arith.constant 0 : i32
    return %c0_i32, %c0_i32_0 : i32, i32
  }
  func.func @transform_14(%arg0: i32) -> (i32, i32) {
    %c0_i32 = arith.constant 0 : i32
    %c0_i32_0 = arith.constant 0 : i32
    %c0_i32_1 = arith.constant 0 : i32
    return %c0_i32, %c0_i32_0 : i32, i32
  }
  func.func @transform_15(%arg0: i32) -> (i32, i32) {
    %c0_i32 = arith.constant 0 : i32
    %c0_i32_0 = arith.constant 0 : i32
    %c0_i32_1 = arith.constant 0 : i32
    return %c0_i32, %c0_i32_0 : i32, i32
  }
  func.func @transform_16(%arg0: i32) -> (i32, i32) {
    %c0_i32 = arith.constant 0 : i32
    %c0_i32_0 = arith.constant 0 : i32
    %c0_i32_1 = arith.constant 0 : i32
    return %c0_i32, %c0_i32_0 : i32, i32
  }
  func.func @transform_17(%arg0: i32) -> (i32, i32, i32) {
    %c0_i32 = arith.constant 0 : i32
    %c0_i32_0 = arith.constant 0 : i32
    %c0_i32_1 = arith.constant 0 : i32
    return %arg0, %c0_i32, %c0_i32_0 : i32, i32, i32
  }
  func.func @transform_18(%arg0: i32) -> (i32, i32, i32) {
    %c0_i32 = arith.constant 0 : i32
    %c0_i32_0 = arith.constant 0 : i32
    %c0_i32_1 = arith.constant 0 : i32
    return %arg0, %c0_i32, %c0_i32_0 : i32, i32, i32
  }
  func.func @transform_19(%arg0: i32) -> (i32, i32, i32) {
    %c0_i32 = arith.constant 0 : i32
    %c0_i32_0 = arith.constant 0 : i32
    %c0_i32_1 = arith.constant 0 : i32
    return %arg0, %c0_i32, %c0_i32_0 : i32, i32, i32
  }
}

</mosaic_0001>

<llo_original>
// kernel: tpu_custom_call.1
$region0: #{tpu_custom_call.1}
  #allocation0 [shape = 'u32[]', space=smem, size = 0x4, offset = 0x4, fixed_abs, tag = 'smem constant byte address 0x4 - core index']
  #allocation1 [shape = 'u32[144,128]{1,0:T(1,128)}', space=vmem, size = 0x12000, scoped, tag = 'internal scratch']
  %s0 = inlined_call_operand.vmem [shape: f32[2,16,32], index: 0, kind: input, shape index: {}]
  %s1 = inlined_call_operand.vmem [shape: f32[2,16,1], index: 1, kind: input, shape index: {}]
  %s2 = inlined_call_operand.hbm [shape: f32[3,32], index: 2, kind: input, shape index: {}]
  %s3 = inlined_call_operand.hbm [shape: f32[3,32], index: 3, kind: input, shape index: {}]
  %s4 = inlined_call_operand.hbm [shape: f32[3,32], index: 4, kind: input, shape index: {}]
  %s5 = inlined_call_operand.hbm [shape: f32[1,32], index: 5, kind: input, shape index: {}]
  %s6 = inlined_call_operand.hbm [shape: f32[1,32], index: 6, kind: input, shape index: {}]
  %s7 = inlined_call_operand.hbm [shape: f32[1,32], index: 7, kind: input, shape index: {}]
  %s8 = inlined_call_operand.hbm [shape: f32[1,32], index: 8, kind: input, shape index: {}]
  %s9 = inlined_call_operand.vmem [shape: f32[1,32], index: 9, kind: input, shape index: {}]
  %s10 = inlined_call_operand.vmem [shape: f32[1,32], index: 10, kind: input, shape index: {}]
  %s11 = inlined_call_operand.vmem [shape: f32[32,32], index: 11, kind: input, shape index: {}]
  %s12 = inlined_call_operand.vmem [shape: f32[1,32], index: 12, kind: input, shape index: {}]
  %s13 = inlined_call_operand.hbm [shape: f32[32,32], index: 13, kind: input, shape index: {}]
  %s14 = inlined_call_operand.vmem [shape: f32[1,32], index: 14, kind: input, shape index: {}]
  %s15 = inlined_call_operand.hbm [shape: f32[32,32], index: 15, kind: input, shape index: {}]
  %s16 = inlined_call_operand.vmem [shape: f32[1,32], index: 16, kind: input, shape index: {}]
  %s17 = inlined_call_operand.hbm [shape: f32[2,16,32], index: 17, kind: output, shape index: {0}]
  %s18 = inlined_call_operand.vmem [shape: f32[2,48,32], index: 18, kind: output, shape index: {1}]
  %s19 = inlined_call_operand.vmem [shape: f32[2,48,32], index: 19, kind: output, shape index: {2}]
  %20 = xla_tuple %s17, %s18, %s19
  %s21 = sld [smem:[#allocation0]]
  $region153: #{tpu_custom_call.1} parent=0
    _
  %s23 = ssub.s32 1, %s21
  %s24 = scalar_select 0, %s23, %s21
  $region1: #{tpu_custom_call.1} parent=0
    #allocation2 [shape = 'u8[2048]{0}', space=vmem, size = 0x800, scoped, tag = 'input window, operand 2, single buffered']
    #allocation3 [shape = 's32[2]{0}', space=sflag, size = 0x8, scoped, tag = 'scoped memory for tpu_custom_call.1']
    #allocation4 [shape = 's32[2]{0}', space=sflag, size = 0x8, scoped, tag = 'scoped memory for tpu_custom_call.1']
    #allocation5 [shape = 'u8[2048]{0}', space=vmem, size = 0x800, scoped, tag = 'input window, operand 3, single buffered']
    #allocation6 [shape = 's32[1]{0}', space=sflag, size = 0x4, scoped, tag = 'scoped memory for tpu_custom_call.1']
    #allocation7 [shape = 'u8[2048]{0}', space=vmem, size = 0x800, scoped, tag = 'input window, operand 4, single buffered']
    #allocation8 [shape = 'u8[512]{0}', space=vmem, size = 0x400, scoped, tag = 'input window, operand 5, single buffered']
    #allocation9 [shape = 's32[1]{0}', space=sflag, size = 0x4, scoped, tag = 'scoped memory for tpu_custom_call.1']
    #allocation10 [shape = 'u8[512]{0}', space=vmem, size = 0x400, scoped, tag = 'input window, operand 6, single buffered']
    #allocation11 [shape = 'u8[512]{0}', space=vmem, size = 0x400, scoped, tag = 'input window, operand 7, single buffered']
    #allocation12 [shape = 's32[1]{0}', space=sflag, size = 0x4, scoped, tag = 'scoped memory for tpu_custom_call.1']
    #allocation13 [shape = 'u8[512]{0}', space=vmem, size = 0x400, scoped, tag = 'input window, operand 8, single buffered']
    #allocation14 [shape = 'u8[16384]{0}', space=vmem, size = 0x4000, scoped, tag = 'input window, operand 13, single buffered']
    #allocation15 [shape = 's32[1]{0}', space=sflag, size = 0x4, scoped, tag = 'scoped memory for tpu_custom_call.1']
    #allocation16 [shape = 'u8[16384]{0}', space=vmem, size = 0x4000, scoped, tag = 'input window, operand 15, single buffered']
    #allocation17 [shape = 'u8[16384]{0}', space=vmem, size = 0x4000, scoped, tag = 'output window, operand 0']
    %25 = vsyncpa [#allocation3], 0
    %26 = vsyncpa [#allocation6], 0
    %27 = vsyncpa [#allocation9], 0
    %28 = vsyncpa [#allocation12], 0
    %29 = vsyncpa [#allocation15], 0
    %30 = vsyncpa [#allocation4], 0
    %s31 = scalar_lea.sflag [#allocation4], 1
    %32 = vsyncpa %s31, 0
    loop: start=0, step=1, limit=4
    $region2: #{tpu_custom_call.1} parent=1 // loop_pre_header
      _
    $region3: #{tpu_custom_call.1} parent=1 // loop_header
      %s34 = sphi 0, %s38
      %p35 = scmp.ge.s32.totalorder %s34, 4
      %s44 = sphi 0, %s46
      %s47 = sphi 0, %s44
      %s48 = sphi 0, %s47
      %s64 = sphi 0, %s48
      %s70 = sphi 0, %s72
      %s73 = sphi 0, %s70
      %s74 = sphi 0, %s73
      %s90 = sphi 0, %s74
      %s94 = sphi 0, %s94
      %s96 = sphi 0, %s94
      %s97 = sphi 0, %s96
      %s111 = sphi 0, %s97
      %s115 = sphi 0, %s115
      %s117 = sphi 0, %s115
      %s118 = sphi 0, %s117
      %s132 = sphi 0, %s118
      %s136 = sphi 0, %s136
      %s138 = sphi 0, %s136
      %s139 = sphi 0, %s138
      %s153 = sphi 0, %s139
      %s157 = sphi 0, %s157
      %s159 = sphi 0, %s157
      %s160 = sphi 0, %s159
      %s174 = sphi 0, %s160
      %s178 = sphi 0, %s178
      %s180 = sphi 0, %s178
      %s181 = sphi 0, %s180
      %s195 = sphi 0, %s181
      %s199 = sphi 0, %s199
      %s201 = sphi 0, %s199
      %s202 = sphi 0, %s201
      %s216 = sphi 0, %s202
      %s220 = sphi 0, %s220
      %s222 = sphi 0, %s220
      %s223 = sphi 0, %s222
      %s237 = sphi 0, %s223
      %s241 = sphi 0, %s241
      %s243 = sphi 0, %s241
      %s244 = sphi 0, %s243
      %s258 = sphi 0, %s244
      %s262 = sphi 0, %s262
      %s264 = sphi 0, %s262
      %s265 = sphi 0, %s264
      %s279 = sphi 0, %s265
      %s283 = sphi 0, %s283
      %s285 = sphi 0, %s283
      %s286 = sphi 0, %s285
      %s300 = sphi 0, %s286
      %s304 = sphi 0, %s304
      %s306 = sphi 0, %s304
      %s307 = sphi 0, %s306
      %s321 = sphi 0, %s307
      %s325 = sphi 0, %s325
      %s327 = sphi 0, %s325
      %s328 = sphi 0, %s327
      %s342 = sphi 0, %s328
      %s346 = sphi 0, %s346
      %s348 = sphi 0, %s346
      %s349 = sphi 0, %s348
      %s363 = sphi 0, %s349
      %s367 = sphi 0, %s367
      %s369 = sphi 0, %s367
      %s370 = sphi 0, %s369
      %s384 = sphi 0, %s370
      %s388 = sphi 0, %s388
      %s390 = sphi 0, %s388
      %s391 = sphi 0, %s390
      %s405 = sphi 0, %s391
      %s411 = sphi 0, %s413
      %s414 = sphi 0, %s411
      %s415 = sphi 0, %s414
      %s431 = sphi 0, %s415
      %s437 = sphi 0, %s439
      %s440 = sphi 0, %s437
      %s441 = sphi 0, %s440
      %s457 = sphi 0, %s441
      %s463 = sphi 0, %s465
      %s466 = sphi 0, %s463
      %s467 = sphi 0, %s466
      %s483 = sphi 0, %s467
    $region4: #{tpu_custom_call.1} parent=1 // loop_header_branch
      %37 = sbr.rel (%p35) target = $region8
    $region5: #{tpu_custom_call.1} parent=1 // loop_body
      %s39 = ssub.s32 %s34, 1
      %s40 = ssub.s32 %s34, 2
      %s41 = sadd.s32 %s34, 1
      %s42 = ssub.s32 %s34, %s41
      %p43 = scmp.eq.s32.totalorder %s42, 0
      %s45 = sadd.s32 %s44, 1
      %s46 = scalar_select %p43, %s44, %s45
      %p49 = pneg %p43
      %p50 = scmp.eq.s32.totalorder %s34, 1
      %p51 = por %p49, %p50
      %p52 = scmp.ne.s32.totalorder %s44, %s47
      %p53 = scmp.eq.s32.totalorder %s34, 0
      %p54 = por %p52, %p53
      %p55 = scmp.ne.s32.totalorder %s44, %s47
      %p56 = scmp.eq.s32.totalorder %s39, 1
      %p57 = por %p55, %p56
      %p58 = scmp.ne.s32.totalorder %s47, %s48
      %p59 = scmp.eq.s32.totalorder %s39, 0
      %p60 = por %p58, %p59
      %p61 = scmp.ne.s32.totalorder %s47, %s48
      %p62 = scmp.eq.s32.totalorder %s40, 1
      %p63 = por %p61, %p62
      %p65 = scmp.ne.s32.totalorder %s48, %s64
      %p66 = scmp.eq.s32.totalorder %s40, 0
      %p67 = por %p65, %p66
      %s68 = ssub.s32 %s34, %s41
      %p69 = scmp.eq.s32.totalorder %s68, 0
      %s71 = sadd.s32 %s70, 1
      %s72 = scalar_select %p69, %s70, %s71
      %p75 = pneg %p69
      %p76 = scmp.eq.s32.totalorder %s34, 1
      %p77 = por %p75, %p76
      %p78 = scmp.ne.s32.totalorder %s70, %s73
      %p79 = scmp.eq.s32.totalorder %s34, 0
      %p80 = por %p78, %p79
      %p81 = scmp.ne.s32.totalorder %s70, %s73
      %p82 = scmp.eq.s32.totalorder %s39, 1
      %p83 = por %p81, %p82
      %p84 = scmp.ne.s32.totalorder %s73, %s74
      %p85 = scmp.eq.s32.totalorder %s39, 0
      %p86 = por %p84, %p85
      %p87 = scmp.ne.s32.totalorder %s73, %s74
      %p88 = scmp.eq.s32.totalorder %s40, 1
      %p89 = por %p87, %p88
      %p91 = scmp.ne.s32.totalorder %s74, %s90
      %p92 = scmp.eq.s32.totalorder %s40, 0
      %p93 = por %p91, %p92
      %s95 = sadd.s32 %s94, 1
      %p98 = scmp.eq.s32.totalorder %s34, 1
      %p99 = scmp.ne.s32.totalorder %s94, %s96
      %p100 = scmp.eq.s32.totalorder %s34, 0
      %p101 = por %p99, %p100
      %p102 = scmp.ne.s32.totalorder %s94, %s96
      %p103 = scmp.eq.s32.totalorder %s39, 1
      %p104 = por %p102, %p103
      %p105 = scmp.ne.s32.totalorder %s96, %s97
      %p106 = scmp.eq.s32.totalorder %s39, 0
      %p107 = por %p105, %p106
      %p108 = scmp.ne.s32.totalorder %s96, %s97
      %p109 = scmp.eq.s32.totalorder %s40, 1
      %p110 = por %p108, %p109
      %p112 = scmp.ne.s32.totalorder %s97, %s111
      %p113 = scmp.eq.s32.totalorder %s40, 0
      %p114 = por %p112, %p113
      %s116 = sadd.s32 %s115, 1
      %p119 = scmp.eq.s32.totalorder %s34, 1
      %p120 = scmp.ne.s32.totalorder %s115, %s117
      %p121 = scmp.eq.s32.totalorder %s34, 0
      %p122 = por %p120, %p121
      %p123 = scmp.ne.s32.totalorder %s115, %s117
      %p124 = scmp.eq.s32.totalorder %s39, 1
      %p125 = por %p123, %p124
      %p126 = scmp.ne.s32.totalorder %s117, %s118
      %p127 = scmp.eq.s32.totalorder %s39, 0
      %p128 = por %p126, %p127
      %p129 = scmp.ne.s32.totalorder %s117, %s118
      %p130 = scmp.eq.s32.totalorder %s40, 1
      %p131 = por %p129, %p130
      %p133 = scmp.ne.s32.totalorder %s118, %s132
      %p134 = scmp.eq.s32.totalorder %s40, 0
      %p135 = por %p133, %p134
      %s137 = sadd.s32 %s136, 1
      %p140 = scmp.eq.s32.totalorder %s34, 1
      %p141 = scmp.ne.s32.totalorder %s136, %s138
      %p142 = scmp.eq.s32.totalorder %s34, 0
      %p143 = por %p141, %p142
      %p144 = scmp.ne.s32.totalorder %s136, %s138
      %p145 = scmp.eq.s32.totalorder %s39, 1
      %p146 = por %p144, %p145
      %p147 = scmp.ne.s32.totalorder %s138, %s139
      %p148 = scmp.eq.s32.totalorder %s39, 0
      %p149 = por %p147, %p148
      %p150 = scmp.ne.s32.totalorder %s138, %s139
      %p151 = scmp.eq.s32.totalorder %s40, 1
      %p152 = por %p150, %p151
      %p154 = scmp.ne.s32.totalorder %s139, %s153
      %p155 = scmp.eq.s32.totalorder %s40, 0
      %p156 = por %p154, %p155
      %s158 = sadd.s32 %s157, 1
      %p161 = scmp.eq.s32.totalorder %s34, 1
      %p162 = scmp.ne.s32.totalorder %s157, %s159
      %p163 = scmp.eq.s32.totalorder %s34, 0
      %p164 = por %p162, %p163
      %p165 = scmp.ne.s32.totalorder %s157, %s159
      %p166 = scmp.eq.s32.totalorder %s39, 1
      %p167 = por %p165, %p166
      %p168 = scmp.ne.s32.totalorder %s159, %s160
      %p169 = scmp.eq.s32.totalorder %s39, 0
      %p170 = por %p168, %p169
      %p171 = scmp.ne.s32.totalorder %s159, %s160
      %p172 = scmp.eq.s32.totalorder %s40, 1
      %p173 = por %p171, %p172
      %p175 = scmp.ne.s32.totalorder %s160, %s174
      %p176 = scmp.eq.s32.totalorder %s40, 0
      %p177 = por %p175, %p176
      %s179 = sadd.s32 %s178, 1
      %p182 = scmp.eq.s32.totalorder %s34, 1
      %p183 = scmp.ne.s32.totalorder %s178, %s180
      %p184 = scmp.eq.s32.totalorder %s34, 0
      %p185 = por %p183, %p184
      %p186 = scmp.ne.s32.totalorder %s178, %s180
      %p187 = scmp.eq.s32.totalorder %s39, 1
      %p188 = por %p186, %p187
      %p189 = scmp.ne.s32.totalorder %s180, %s181
      %p190 = scmp.eq.s32.totalorder %s39, 0
      %p191 = por %p189, %p190
      %p192 = scmp.ne.s32.totalorder %s180, %s181
      %p193 = scmp.eq.s32.totalorder %s40, 1
      %p194 = por %p192, %p193
      %p196 = scmp.ne.s32.totalorder %s181, %s195
      %p197 = scmp.eq.s32.totalorder %s40, 0
      %p198 = por %p196, %p197
      %s200 = sadd.s32 %s199, 1
      %p203 = scmp.eq.s32.totalorder %s34, 1
      %p204 = scmp.ne.s32.totalorder %s199, %s201
      %p205 = scmp.eq.s32.totalorder %s34, 0
      %p206 = por %p204, %p205
      %p207 = scmp.ne.s32.totalorder %s199, %s201
      %p208 = scmp.eq.s32.totalorder %s39, 1
      %p209 = por %p207, %p208
      %p210 = scmp.ne.s32.totalorder %s201, %s202
      %p211 = scmp.eq.s32.totalorder %s39, 0
      %p212 = por %p210, %p211
      %p213 = scmp.ne.s32.totalorder %s201, %s202
      %p214 = scmp.eq.s32.totalorder %s40, 1
      %p215 = por %p213, %p214
      %p217 = scmp.ne.s32.totalorder %s202, %s216
      %p218 = scmp.eq.s32.totalorder %s40, 0
      %p219 = por %p217, %p218
      %s221 = sadd.s32 %s220, 1
      %p224 = scmp.eq.s32.totalorder %s34, 1
      %p225 = scmp.ne.s32.totalorder %s220, %s222
      %p226 = scmp.eq.s32.totalorder %s34, 0
      %p227 = por %p225, %p226
      %p228 = scmp.ne.s32.totalorder %s220, %s222
      %p229 = scmp.eq.s32.totalorder %s39, 1
      %p230 = por %p228, %p229
      %p231 = scmp.ne.s32.totalorder %s222, %s223
      %p232 = scmp.eq.s32.totalorder %s39, 0
      %p233 = por %p231, %p232
      %p234 = scmp.ne.s32.totalorder %s222, %s223
      %p235 = scmp.eq.s32.totalorder %s40, 1
      %p236 = por %p234, %p235
      %p238 = scmp.ne.s32.totalorder %s223, %s237
      %p239 = scmp.eq.s32.totalorder %s40, 0
      %p240 = por %p238, %p239
      %s242 = sadd.s32 %s241, 1
      %p245 = scmp.eq.s32.totalorder %s34, 1
      %p246 = scmp.ne.s32.totalorder %s241, %s243
      %p247 = scmp.eq.s32.totalorder %s34, 0
      %p248 = por %p246, %p247
      %p249 = scmp.ne.s32.totalorder %s241, %s243
      %p250 = scmp.eq.s32.totalorder %s39, 1
      %p251 = por %p249, %p250
      %p252 = scmp.ne.s32.totalorder %s243, %s244
      %p253 = scmp.eq.s32.totalorder %s39, 0
      %p254 = por %p252, %p253
      %p255 = scmp.ne.s32.totalorder %s243, %s244
      %p256 = scmp.eq.s32.totalorder %s40, 1
      %p257 = por %p255, %p256
      %p259 = scmp.ne.s32.totalorder %s244, %s258
      %p260 = scmp.eq.s32.totalorder %s40, 0
      %p261 = por %p259, %p260
      %s263 = sadd.s32 %s262, 1
      %p266 = scmp.eq.s32.totalorder %s34, 1
      %p267 = scmp.ne.s32.totalorder %s262, %s264
      %p268 = scmp.eq.s32.totalorder %s34, 0
      %p269 = por %p267, %p268
      %p270 = scmp.ne.s32.totalorder %s262, %s264
      %p271 = scmp.eq.s32.totalorder %s39, 1
      %p272 = por %p270, %p271
      %p273 = scmp.ne.s32.totalorder %s264, %s265
      %p274 = scmp.eq.s32.totalorder %s39, 0
      %p275 = por %p273, %p274
      %p276 = scmp.ne.s32.totalorder %s264, %s265
      %p277 = scmp.eq.s32.totalorder %s40, 1
      %p278 = por %p276, %p277
      %p280 = scmp.ne.s32.totalorder %s265, %s279
      %p281 = scmp.eq.s32.totalorder %s40, 0
      %p282 = por %p280, %p281
      %s284 = sadd.s32 %s283, 1
      %p287 = scmp.eq.s32.totalorder %s34, 1
      %p288 = scmp.ne.s32.totalorder %s283, %s285
      %p289 = scmp.eq.s32.totalorder %s34, 0
      %p290 = por %p288, %p289
      %p291 = scmp.ne.s32.totalorder %s283, %s285
      %p292 = scmp.eq.s32.totalorder %s39, 1
      %p293 = por %p291, %p292
      %p294 = scmp.ne.s32.totalorder %s285, %s286
      %p295 = scmp.eq.s32.totalorder %s39, 0
      %p296 = por %p294, %p295
      %p297 = scmp.ne.s32.totalorder %s285, %s286
      %p298 = scmp.eq.s32.totalorder %s40, 1
      %p299 = por %p297, %p298
      %p301 = scmp.ne.s32.totalorder %s286, %s300
      %p302 = scmp.eq.s32.totalorder %s40, 0
      %p303 = por %p301, %p302
      %s305 = sadd.s32 %s304, 1
      %p308 = scmp.eq.s32.totalorder %s34, 1
      %p309 = scmp.ne.s32.totalorder %s304, %s306
      %p310 = scmp.eq.s32.totalorder %s34, 0
      %p311 = por %p309, %p310
      %p312 = scmp.ne.s32.totalorder %s304, %s306
      %p313 = scmp.eq.s32.totalorder %s39, 1
      %p314 = por %p312, %p313
      %p315 = scmp.ne.s32.totalorder %s306, %s307
      %p316 = scmp.eq.s32.totalorder %s39, 0
      %p317 = por %p315, %p316
      %p318 = scmp.ne.s32.totalorder %s306, %s307
      %p319 = scmp.eq.s32.totalorder %s40, 1
      %p320 = por %p318, %p319
      %p322 = scmp.ne.s32.totalorder %s307, %s321
      %p323 = scmp.eq.s32.totalorder %s40, 0
      %p324 = por %p322, %p323
      %s326 = sadd.s32 %s325, 1
      %p329 = scmp.eq.s32.totalorder %s34, 1
      %p330 = scmp.ne.s32.totalorder %s325, %s327
      %p331 = scmp.eq.s32.totalorder %s34, 0
      %p332 = por %p330, %p331
      %p333 = scmp.ne.s32.totalorder %s325, %s327
      %p334 = scmp.eq.s32.totalorder %s39, 1
      %p335 = por %p333, %p334
      %p336 = scmp.ne.s32.totalorder %s327, %s328
      %p337 = scmp.eq.s32.totalorder %s39, 0
      %p338 = por %p336, %p337
      %p339 = scmp.ne.s32.totalorder %s327, %s328
      %p340 = scmp.eq.s32.totalorder %s40, 1
      %p341 = por %p339, %p340
      %p343 = scmp.ne.s32.totalorder %s328, %s342
      %p344 = scmp.eq.s32.totalorder %s40, 0
      %p345 = por %p343, %p344
      %s347 = sadd.s32 %s346, 1
      %p350 = scmp.eq.s32.totalorder %s34, 1
      %p351 = scmp.ne.s32.totalorder %s346, %s348
      %p352 = scmp.eq.s32.totalorder %s34, 0
      %p353 = por %p351, %p352
      %p354 = scmp.ne.s32.totalorder %s346, %s348
      %p355 = scmp.eq.s32.totalorder %s39, 1
      %p356 = por %p354, %p355
      %p357 = scmp.ne.s32.totalorder %s348, %s349
      %p358 = scmp.eq.s32.totalorder %s39, 0
      %p359 = por %p357, %p358
      %p360 = scmp.ne.s32.totalorder %s348, %s349
      %p361 = scmp.eq.s32.totalorder %s40, 1
      %p362 = por %p360, %p361
      %p364 = scmp.ne.s32.totalorder %s349, %s363
      %p365 = scmp.eq.s32.totalorder %s40, 0
      %p366 = por %p364, %p365
      %s368 = sadd.s32 %s367, 1
      %p371 = scmp.eq.s32.totalorder %s34, 1
      %p372 = scmp.ne.s32.totalorder %s367, %s369
      %p373 = scmp.eq.s32.totalorder %s34, 0
      %p374 = por %p372, %p373
      %p375 = scmp.ne.s32.totalorder %s367, %s369
      %p376 = scmp.eq.s32.totalorder %s39, 1
      %p377 = por %p375, %p376
      %p378 = scmp.ne.s32.totalorder %s369, %s370
      %p379 = scmp.eq.s32.totalorder %s39, 0
      %p380 = por %p378, %p379
      %p381 = scmp.ne.s32.totalorder %s369, %s370
      %p382 = scmp.eq.s32.totalorder %s40, 1
      %p383 = por %p381, %p382
      %p385 = scmp.ne.s32.totalorder %s370, %s384
      %p386 = scmp.eq.s32.totalorder %s40, 0
      %p387 = por %p385, %p386
      %s389 = sadd.s32 %s388, 1
      %p392 = scmp.eq.s32.totalorder %s34, 1
      %p393 = scmp.ne.s32.totalorder %s388, %s390
      %p394 = scmp.eq.s32.totalorder %s34, 0
      %p395 = por %p393, %p394
      %p396 = scmp.ne.s32.totalorder %s388, %s390
      %p397 = scmp.eq.s32.totalorder %s39, 1
      %p398 = por %p396, %p397
      %p399 = scmp.ne.s32.totalorder %s390, %s391
      %p400 = scmp.eq.s32.totalorder %s39, 0
      %p401 = por %p399, %p400
      %p402 = scmp.ne.s32.totalorder %s390, %s391
      %p403 = scmp.eq.s32.totalorder %s40, 1
      %p404 = por %p402, %p403
      %p406 = scmp.ne.s32.totalorder %s391, %s405
      %p407 = scmp.eq.s32.totalorder %s40, 0
      %p408 = por %p406, %p407
      %s409 = ssub.s32 %s34, %s41
      %p410 = scmp.eq.s32.totalorder %s409, 0
      %s412 = sadd.s32 %s411, 1
      %s413 = scalar_select %p410, %s411, %s412
      %p416 = pneg %p410
      %p417 = scmp.eq.s32.totalorder %s34, 1
      %p418 = por %p416, %p417
      %p419 = scmp.ne.s32.totalorder %s411, %s414
      %p420 = scmp.eq.s32.totalorder %s34, 0
      %p421 = por %p419, %p420
      %p422 = scmp.ne.s32.totalorder %s411, %s414
      %p423 = scmp.eq.s32.totalorder %s39, 1
      %p424 = por %p422, %p423
      %p425 = scmp.ne.s32.totalorder %s414, %s415
      %p426 = scmp.eq.s32.totalorder %s39, 0
      %p427 = por %p425, %p426
      %p428 = scmp.ne.s32.totalorder %s414, %s415
      %p429 = scmp.eq.s32.totalorder %s40, 1
      %p430 = por %p428, %p429
      %p432 = scmp.ne.s32.totalorder %s415, %s431
      %p433 = scmp.eq.s32.totalorder %s40, 0
      %p434 = por %p432, %p433
      %s435 = ssub.s32 %s34, %s41
      %p436 = scmp.eq.s32.totalorder %s435, 0
      %s438 = sadd.s32 %s437, 1
      %s439 = scalar_select %p436, %s437, %s438
      %p442 = pneg %p436
      %p443 = scmp.eq.s32.totalorder %s34, 1
      %p444 = por %p442, %p443
      %p445 = scmp.ne.s32.totalorder %s437, %s440
      %p446 = scmp.eq.s32.totalorder %s34, 0
      %p447 = por %p445, %p446
      %p448 = scmp.ne.s32.totalorder %s437, %s440
      %p449 = scmp.eq.s32.totalorder %s39, 1
      %p450 = por %p448, %p449
      %p451 = scmp.ne.s32.totalorder %s440, %s441
      %p452 = scmp.eq.s32.totalorder %s39, 0
      %p453 = por %p451, %p452
      %p454 = scmp.ne.s32.totalorder %s440, %s441
      %p455 = scmp.eq.s32.totalorder %s40, 1
      %p456 = por %p454, %p455
      %p458 = scmp.ne.s32.totalorder %s441, %s457
      %p459 = scmp.eq.s32.totalorder %s40, 0
      %p460 = por %p458, %p459
      %s461 = ssub.s32 %s34, %s41
      %p462 = scmp.eq.s32.totalorder %s461, 0
      %s464 = sadd.s32 %s463, 1
      %s465 = scalar_select %p462, %s463, %s464
      %p468 = pneg %p462
      %p469 = scmp.eq.s32.totalorder %s34, 1
      %p470 = por %p468, %p469
      %p471 = scmp.ne.s32.totalorder %s463, %s466
      %p472 = scmp.eq.s32.totalorder %s34, 0
      %p473 = por %p471, %p472
      %p474 = scmp.ne.s32.totalorder %s463, %s466
      %p475 = scmp.eq.s32.totalorder %s39, 1
      %p476 = por %p474, %p475
      %p477 = scmp.ne.s32.totalorder %s466, %s467
      %p478 = scmp.eq.s32.totalorder %s39, 0
      %p479 = por %p477, %p478
      %p480 = scmp.ne.s32.totalorder %s466, %s467
      %p481 = scmp.eq.s32.totalorder %s40, 1
      %p482 = por %p480, %p481
      %p484 = scmp.ne.s32.totalorder %s467, %s483
      %p485 = scmp.eq.s32.totalorder %s40, 0
      %p486 = por %p484, %p485
      %p487 = scmp.le.s32.totalorder 1, %s34
      %p488 = scmp.lt.s32.totalorder %s34, 3
      %p489 = pnand %p487, %p488
      %p490 = pneg %p489
      // Predicated region
      $region9: #{tpu_custom_call.1} parent=5 // pred_check
        _
      $region10: #{tpu_custom_call.1} parent=5 // pred_check_branch
        %492 = sbr.rel (%p489) target = $region12
      $region11: #{tpu_custom_call.1} parent=5 // pred_region
        %s493 = ssub.s32 %s34, 1
        // Predicated region
        $region13: #{tpu_custom_call.1} parent=11 // pred_check
          %p494 = pneg %p107
        $region14: #{tpu_custom_call.1} parent=11 // pred_check_branch
          %496 = sbr.rel (%p494) target = $region16
        $region15: #{tpu_custom_call.1} parent=11 // pred_region
          %s498 = ssub.s32 64, 64
          %499 = vsyncadd [#allocation3], %s498
          %s501 = sshll.u32 [#allocation2], 4
          %s502 = int_to_ptr.vmem [resolvable:$true] %s501
          %504 = dma.hbm_to_vmem [thread:$0]  %s2, 64, %s502, [#allocation3]
        $region16: #{tpu_custom_call.1} parent=11 // pred_fallthru
          _
        // Predicated region
        $region17: #{tpu_custom_call.1} parent=11 // pred_check
          %p505 = pneg %p128
        $region18: #{tpu_custom_call.1} parent=11 // pred_check_branch
          %507 = sbr.rel (%p505) target = $region20
        $region19: #{tpu_custom_call.1} parent=11 // pred_region
          %s509 = ssub.s32 64, 64
          %510 = vsyncadd [#allocation6], %s509
          %s512 = sshll.u32 [#allocation5], 4
          %s513 = int_to_ptr.vmem [resolvable:$true] %s512
          %515 = dma.hbm_to_vmem [thread:$0]  %s3, 64, %s513, [#allocation6]
        $region20: #{tpu_custom_call.1} parent=11 // pred_fallthru
          _
        // Predicated region
        $region21: #{tpu_custom_call.1} parent=11 // pred_check
          %p516 = pneg %p149
        $region22: #{tpu_custom_call.1} parent=11 // pred_check_branch
          %518 = sbr.rel (%p516) target = $region24
        $region23: #{tpu_custom_call.1} parent=11 // pred_region
          %s520 = ssub.s32 64, 64
          %521 = vsyncadd [#allocation6], %s520
          %s523 = sshll.u32 [#allocation7], 4
          %s524 = int_to_ptr.vmem [resolvable:$true] %s523
          %526 = dma.hbm_to_vmem [thread:$0]  %s4, 64, %s524, [#allocation6]
        $region24: #{tpu_custom_call.1} parent=11 // pred_fallthru
          _
        // Predicated region
        $region25: #{tpu_custom_call.1} parent=11 // pred_check
          %p527 = pneg %p170
        $region26: #{tpu_custom_call.1} parent=11 // pred_check_branch
          %529 = sbr.rel (%p527) target = $region28
        $region27: #{tpu_custom_call.1} parent=11 // pred_region
          %s531 = ssub.s32 16, 16
          %532 = vsyncadd [#allocation9], %s531
          %s534 = sshll.u32 [#allocation8], 4
          %s535 = int_to_ptr.vmem [resolvable:$true] %s534
          %537 = dma.hbm_to_vmem [thread:$0]  %s5, 16, %s535, [#allocation9]
        $region28: #{tpu_custom_call.1} parent=11 // pred_fallthru
          _
        // Predicated region
        $region29: #{tpu_custom_call.1} parent=11 // pred_check
          %p538 = pneg %p191
        $region30: #{tpu_custom_call.1} parent=11 // pred_check_branch
          %540 = sbr.rel (%p538) target = $region32
        $region31: #{tpu_custom_call.1} parent=11 // pred_region
          %s542 = ssub.s32 16, 16
          %543 = vsyncadd [#allocation9], %s542
          %s545 = sshll.u32 [#allocation10], 4
          %s546 = int_to_ptr.vmem [resolvable:$true] %s545
          %548 = dma.hbm_to_vmem [thread:$0]  %s6, 16, %s546, [#allocation9]
        $region32: #{tpu_custom_call.1} parent=11 // pred_fallthru
          _
        // Predicated region
        $region33: #{tpu_custom_call.1} parent=11 // pred_check
          %p549 = pneg %p212
        $region34: #{tpu_custom_call.1} parent=11 // pred_check_branch
          %551 = sbr.rel (%p549) target = $region36
        $region35: #{tpu_custom_call.1} parent=11 // pred_region
          %s553 = ssub.s32 16, 16
          %554 = vsyncadd [#allocation12], %s553
          %s556 = sshll.u32 [#allocation11], 4
          %s557 = int_to_ptr.vmem [resolvable:$true] %s556
          %559 = dma.hbm_to_vmem [thread:$0]  %s7, 16, %s557, [#allocation12]
        $region36: #{tpu_custom_call.1} parent=11 // pred_fallthru
          _
        // Predicated region
        $region37: #{tpu_custom_call.1} parent=11 // pred_check
          %p560 = pneg %p233
        $region38: #{tpu_custom_call.1} parent=11 // pred_check_branch
          %562 = sbr.rel (%p560) target = $region40
        $region39: #{tpu_custom_call.1} parent=11 // pred_region
          %s564 = ssub.s32 16, 16
          %565 = vsyncadd [#allocation12], %s564
          %s567 = sshll.u32 [#allocation13], 4
          %s568 = int_to_ptr.vmem [resolvable:$true] %s567
          %570 = dma.hbm_to_vmem [thread:$0]  %s8, 16, %s568, [#allocation12]
        $region40: #{tpu_custom_call.1} parent=11 // pred_fallthru
          _
        // Predicated region
        $region41: #{tpu_custom_call.1} parent=11 // pred_check
          %p571 = pneg %p254
        $region42: #{tpu_custom_call.1} parent=11 // pred_check_branch
          %573 = sbr.rel (%p571) target = $region44
        $region43: #{tpu_custom_call.1} parent=11 // pred_region
          _
        $region44: #{tpu_custom_call.1} parent=11 // pred_fallthru
          _
        // Predicated region
        $region45: #{tpu_custom_call.1} parent=11 // pred_check
          %p574 = pneg %p275
        $region46: #{tpu_custom_call.1} parent=11 // pred_check_branch
          %576 = sbr.rel (%p574) target = $region48
        $region47: #{tpu_custom_call.1} parent=11 // pred_region
          _
        $region48: #{tpu_custom_call.1} parent=11 // pred_fallthru
          _
        // Predicated region
        $region49: #{tpu_custom_call.1} parent=11 // pred_check
          %p577 = pneg %p296
        $region50: #{tpu_custom_call.1} parent=11 // pred_check_branch
          %579 = sbr.rel (%p577) target = $region52
        $region51: #{tpu_custom_call.1} parent=11 // pred_region
          _
        $region52: #{tpu_custom_call.1} parent=11 // pred_fallthru
          _
        // Predicated region
        $region53: #{tpu_custom_call.1} parent=11 // pred_check
          %p580 = pneg %p317
        $region54: #{tpu_custom_call.1} parent=11 // pred_check_branch
          %582 = sbr.rel (%p580) target = $region56
        $region55: #{tpu_custom_call.1} parent=11 // pred_region
          _
        $region56: #{tpu_custom_call.1} parent=11 // pred_fallthru
          _
        // Predicated region
        $region57: #{tpu_custom_call.1} parent=11 // pred_check
          %p583 = pneg %p338
        $region58: #{tpu_custom_call.1} parent=11 // pred_check_branch
          %585 = sbr.rel (%p583) target = $region60
        $region59: #{tpu_custom_call.1} parent=11 // pred_region
          %s587 = ssub.s32 512, 512
          %588 = vsyncadd [#allocation15], %s587
          %s589 = sshll.u32 [#allocation14], 4
          %s590 = int_to_ptr.vmem [resolvable:$true] %s589
          %595 = dma.hbm_to_vmem [thread:$0]  %s13, 512, %s590, [#allocation15], 128, 128, 8
        $region60: #{tpu_custom_call.1} parent=11 // pred_fallthru
          _
        // Predicated region
        $region61: #{tpu_custom_call.1} parent=11 // pred_check
          %p596 = pneg %p359
        $region62: #{tpu_custom_call.1} parent=11 // pred_check_branch
          %598 = sbr.rel (%p596) target = $region64
        $region63: #{tpu_custom_call.1} parent=11 // pred_region
          _
        $region64: #{tpu_custom_call.1} parent=11 // pred_fallthru
          _
        // Predicated region
        $region65: #{tpu_custom_call.1} parent=11 // pred_check
          %p599 = pneg %p380
        $region66: #{tpu_custom_call.1} parent=11 // pred_check_branch
          %601 = sbr.rel (%p599) target = $region68
        $region67: #{tpu_custom_call.1} parent=11 // pred_region
          %s603 = ssub.s32 512, 512
          %604 = vsyncadd [#allocation15], %s603
          %s605 = sshll.u32 [#allocation16], 4
          %s606 = int_to_ptr.vmem [resolvable:$true] %s605
          %611 = dma.hbm_to_vmem [thread:$0]  %s15, 512, %s606, [#allocation15], 128, 128, 8
        $region68: #{tpu_custom_call.1} parent=11 // pred_fallthru
          _
        // Predicated region
        $region69: #{tpu_custom_call.1} parent=11 // pred_check
          %p612 = pneg %p401
        $region70: #{tpu_custom_call.1} parent=11 // pred_check_branch
          %614 = sbr.rel (%p612) target = $region72
        $region71: #{tpu_custom_call.1} parent=11 // pred_region
          _
        $region72: #{tpu_custom_call.1} parent=11 // pred_fallthru
          _
      $region12: #{tpu_custom_call.1} parent=5 // pred_fallthru
        _
      %p615 = scmp.lt.s32.totalorder %s34, 2
      // Predicated region
      $region73: #{tpu_custom_call.1} parent=5 // pred_check
        %p616 = pneg %p615
      $region74: #{tpu_custom_call.1} parent=5 // pred_check_branch
        %618 = sbr.rel (%p616) target = $region76
      $region75: #{tpu_custom_call.1} parent=5 // pred_region
        // Predicated region
        $region77: #{tpu_custom_call.1} parent=75 // pred_check
          %p619 = pneg %p54
        $region78: #{tpu_custom_call.1} parent=75 // pred_check_branch
          %621 = sbr.rel (%p619) target = $region80
        $region79: #{tpu_custom_call.1} parent=75 // pred_region
          %p622 = scmp.lt.s32.totalorder %s34, 1
          %s623 = scalar_select %p622, %s34, 1
          %s624 = smul.addr %s623, 2
          %s625 = smul.addr %s624, 8
          %s626 = scalar_lea.vmem %s0, %s625
        $region80: #{tpu_custom_call.1} parent=75 // pred_fallthru
          _
        // Predicated region
        $region81: #{tpu_custom_call.1} parent=75 // pred_check
          %p627 = pneg %p80
        $region82: #{tpu_custom_call.1} parent=75 // pred_check_branch
          %629 = sbr.rel (%p627) target = $region84
        $region83: #{tpu_custom_call.1} parent=75 // pred_region
          %p630 = scmp.lt.s32.totalorder %s34, 1
          %s631 = scalar_select %p630, %s34, 1
          %s632 = smul.addr %s631, 2
          %s633 = smul.addr %s632, 8
          %s634 = scalar_lea.vmem %s1, %s633
        $region84: #{tpu_custom_call.1} parent=75 // pred_fallthru
          _
      $region76: #{tpu_custom_call.1} parent=5 // pred_fallthru
        _
      %p635 = scmp.le.s32.totalorder 1, %s34
      %p636 = scmp.lt.s32.totalorder %s34, 3
      %p637 = pnand %p635, %p636
      %p638 = pneg %p637
      // Predicated region
      $region85: #{tpu_custom_call.1} parent=5 // pred_check
        _
      $region86: #{tpu_custom_call.1} parent=5 // pred_check_branch
        %640 = sbr.rel (%p637) target = $region88
      $region87: #{tpu_custom_call.1} parent=5 // pred_region
        %s641 = ssub.s32 %s34, 1
        // Predicated region
        $region89: #{tpu_custom_call.1} parent=87 // pred_check
          %p642 = pneg %p107
        $region90: #{tpu_custom_call.1} parent=87 // pred_check_branch
          %644 = sbr.rel (%p642) target = $region92
        $region91: #{tpu_custom_call.1} parent=87 // pred_region
          %645 = dma.done [#allocation3], 64
        $region92: #{tpu_custom_call.1} parent=87 // pred_fallthru
          _
        // Predicated region
        $region93: #{tpu_custom_call.1} parent=87 // pred_check
          %p646 = pneg %p128
        $region94: #{tpu_custom_call.1} parent=87 // pred_check_branch
          %648 = sbr.rel (%p646) target = $region96
        $region95: #{tpu_custom_call.1} parent=87 // pred_region
          %649 = dma.done [#allocation6], 64
        $region96: #{tpu_custom_call.1} parent=87 // pred_fallthru
          _
        // Predicated region
        $region97: #{tpu_custom_call.1} parent=87 // pred_check
          %p650 = pneg %p149
        $region98: #{tpu_custom_call.1} parent=87 // pred_check_branch
          %652 = sbr.rel (%p650) target = $region100
        $region99: #{tpu_custom_call.1} parent=87 // pred_region
          %653 = dma.done [#allocation6], 64
        $region100: #{tpu_custom_call.1} parent=87 // pred_fallthru
          _
        // Predicated region
        $region101: #{tpu_custom_call.1} parent=87 // pred_check
          %p654 = pneg %p170
        $region102: #{tpu_custom_call.1} parent=87 // pred_check_branch
          %656 = sbr.rel (%p654) target = $region104
        $region103: #{tpu_custom_call.1} parent=87 // pred_region
          %657 = dma.done [#allocation9], 16
        $region104: #{tpu_custom_call.1} parent=87 // pred_fallthru
          _
        // Predicated region
        $region105: #{tpu_custom_call.1} parent=87 // pred_check
          %p658 = pneg %p191
        $region106: #{tpu_custom_call.1} parent=87 // pred_check_branch
          %660 = sbr.rel (%p658) target = $region108
        $region107: #{tpu_custom_call.1} parent=87 // pred_region
          %661 = dma.done [#allocation9], 16
        $region108: #{tpu_custom_call.1} parent=87 // pred_fallthru
          _
        // Predicated region
        $region109: #{tpu_custom_call.1} parent=87 // pred_check
          %p662 = pneg %p212
        $region110: #{tpu_custom_call.1} parent=87 // pred_check_branch
          %664 = sbr.rel (%p662) target = $region112
        $region111: #{tpu_custom_call.1} parent=87 // pred_region
          %665 = dma.done [#allocation12], 16
        $region112: #{tpu_custom_call.1} parent=87 // pred_fallthru
          _
        // Predicated region
        $region113: #{tpu_custom_call.1} parent=87 // pred_check
          %p666 = pneg %p233
        $region114: #{tpu_custom_call.1} parent=87 // pred_check_branch
          %668 = sbr.rel (%p666) target = $region116
        $region115: #{tpu_custom_call.1} parent=87 // pred_region
          %669 = dma.done [#allocation12], 16
        $region116: #{tpu_custom_call.1} parent=87 // pred_fallthru
          _
        // Predicated region
        $region117: #{tpu_custom_call.1} parent=87 // pred_check
          %p670 = pneg %p338
        $region118: #{tpu_custom_call.1} parent=87 // pred_check_branch
          %672 = sbr.rel (%p670) target = $region120
        $region119: #{tpu_custom_call.1} parent=87 // pred_region
          %673 = dma.done [#allocation15], 512
        $region120: #{tpu_custom_call.1} parent=87 // pred_fallthru
          _
        // Predicated region
        $region121: #{tpu_custom_call.1} parent=87 // pred_check
          %p674 = pneg %p380
        $region122: #{tpu_custom_call.1} parent=87 // pred_check_branch
          %676 = sbr.rel (%p674) target = $region124
        $region123: #{tpu_custom_call.1} parent=87 // pred_region
          %677 = dma.done [#allocation15], 512
        $region124: #{tpu_custom_call.1} parent=87 // pred_fallthru
          _
        %p678 = scmp.lt.s32.totalorder %s39, 1
        %s679 = scalar_select %p678, %s39, 1
        %s680 = smul.addr %s679, 2
        %s681 = smul.addr %s680, 8
        %s682 = scalar_lea.vmem %s0, %s681
        %p683 = pneg %p60
        %p684 = pneg %p57
        %p685 = scmp.lt.s32.totalorder %s39, 1
        %s686 = scalar_select %p685, %s39, 1
        %s687 = smul.addr %s686, 2
        %s688 = smul.addr %s687, 8
        %s689 = scalar_lea.vmem %s1, %s688
        %p690 = pneg %p86
        %p691 = pneg %p83
        %p692 = pneg %p107
        %p693 = pneg %p104
        %p694 = pneg %p128
        %p695 = pneg %p125
        %p696 = pneg %p149
        %p697 = pneg %p146
        %p698 = pneg %p170
        %p699 = pneg %p167
        %p700 = pneg %p191
        %p701 = pneg %p188
        %p702 = pneg %p212
        %p703 = pneg %p209
        %p704 = pneg %p233
        %p705 = pneg %p230
        %p706 = pneg %p254
        %p707 = pneg %p251
        %p708 = pneg %p275
        %p709 = pneg %p272
        %p710 = pneg %p296
        %p711 = pneg %p293
        %p712 = pneg %p317
        %p713 = pneg %p314
        %p714 = pneg %p338
        %p715 = pneg %p335
        %p716 = pneg %p359
        %p717 = pneg %p356
        %p718 = pneg %p380
        %p719 = pneg %p377
        %p720 = pneg %p401
        %p721 = pneg %p398
        %p722 = pneg %p427
        %p723 = pneg %p424
        %s724 = sand.u32 %s414, 1
        %s725 = scalar_lea.sflag [#allocation4], %s724
        %s726 = sand.u32 %s414, 1
        %s727 = smul.addr %s726, 16
        %s728 = scalar_lea.vmem [#allocation17], %s727
        %p729 = pneg %p453
        %p730 = pneg %p450
        %p731 = scmp.lt.s32.totalorder %s39, 1
        %s732 = scalar_select %p731, %s39, 1
        %s733 = smul.addr %s732, 6
        %s734 = smul.addr %s733, 8
        %s735 = scalar_lea.vmem %s18, %s734
        %p736 = pneg %p479
        %p737 = pneg %p476
        %p738 = scmp.lt.s32.totalorder %s39, 1
        %s739 = scalar_select %p738, %s39, 1
        %s740 = smul.addr %s739, 6
        %s741 = smul.addr %s740, 8
        %s742 = scalar_lea.vmem %s19, %s741
        %p743 = scmp.lt.s32.totalorder %s39, 1
        %s744 = scalar_select %p743, %s39, 1
        %s745 = smul.addr %s744, 2
        %s746 = smul.addr %s745, 8
        %s747 = scalar_lea.vmem %s0, %s746
        %p748 = scmp.lt.s32.totalorder %s39, 1
        %s749 = scalar_select %p748, %s39, 1
        %s750 = smul.addr %s749, 2
        %s751 = smul.addr %s750, 8
        %s752 = scalar_lea.vmem %s1, %s751
        %p753 = scmp.lt.s32.totalorder %s39, 1
        %s754 = scalar_select %p753, %s39, 1
        %s755 = smul.addr %s754, 6
        %s756 = smul.addr %s755, 8
        %s757 = scalar_lea.vmem %s18, %s756
        %p758 = scmp.lt.s32.totalorder %s39, 1
        %s759 = scalar_select %p758, %s39, 1
        %s760 = smul.addr %s759, 6
        %s761 = smul.addr %s760, 8
        %s762 = scalar_lea.vmem %s19, %s761
        %v763 = vld [vmem:[%s747] sm:$0xff]
        %v764 = vld [vmem:[%s747 + $0x8] sm:$0xff]
        %v765 = vld [vmem:[%s752] sm:$0xff]
        %v766 = vld [vmem:[%s752 + $0x8] sm:$0xff]
        %vm769 = vcmask 1040384
        %v770 = vrot.slane %v763, 7
        %v771 = vrot.slane %v764, 7
        %v772 = vsel %vm769, %v770, %v771
        %v775 = vsel %vm769, 0.0, %v770
        %vm776 = vcmask 1046528
        %v777 = vrot.slane %v763, 1
        %v778 = vrot.slane %v764, 1
        %v779 = vsel %vm776, %v777, %v778
        %v782 = vsel %vm776, %v778, 0.0
        %v783 = vld [vmem:[#allocation2] sm:$0x7]
        %v784 = vlaneseq
        %v785 = vshrl.u32 %v784, 7
        %v786 = vsub.s32 0, %v785
        %v787 = vrot.slane %v783, %v786
        %v788 = vmul.f32 %v775, %v787
        %v789 = vmul.f32 %v772, %v787
        %v790 = vlaneseq
        %v791 = vshrl.u32 %v790, 7
        %v792 = vsub.s32 1, %v791
        %v793 = vrot.slane %v783, %v792
        %v794 = vmul.f32 %v763, %v793
        %v795 = vmul.f32 %v764, %v793
        %v796 = vadd.f32 %v788, %v794
        %v797 = vadd.f32 %v789, %v795
        %v798 = vlaneseq
        %v799 = vshrl.u32 %v798, 7
        %v800 = vsub.s32 2, %v799
        %v801 = vrot.slane %v783, %v800
        %v802 = vmul.f32 %v779, %v801
        %v803 = vmul.f32 %v782, %v801
        %v804 = vadd.f32 %v796, %v802
        %v805 = vadd.f32 %v797, %v803
        %807 = vset.pattern.permute.xlu0 0
        %808 = vperm.xlu0 %807, %v765
        %v809 = vpop.permute.xlu0 %808
        %812 = vset.pattern.permute.xlu0 0
        %813 = vperm.xlu0 %812, %v766
        %v814 = vpop.permute.xlu0 %813
        %v816 = vmul.f32 %v804, %v809
        %v817 = vmul.f32 %v805, %v814
        %vm818 = vcmask 261120
        %v819 = vsel %vm818, %v816, 0.0
        %820 = vadd.xlane.f32.xlu0 %v819
        %v821 = vpop.xlane.xlu0 %820
        %v822 = vsel %vm818, %v817, 0.0
        %823 = vadd.xlane.f32.xlu0 %v822
        %v824 = vpop.xlane.xlu0 %823
        %v825 = vrcp.pop 32.0
        %v826 = vmul.f32 %v821, %v825
        %v827 = vmul.f32 %v824, %v825
        %v828 = vsub.f32 %v816, %v826
        %v829 = vsub.f32 %v817, %v827
        %v830 = vmul.f32 %v828, %v828
        %v831 = vmul.f32 %v829, %v829
        %v832 = vsel %vm818, %v830, 0.0
        %833 = vadd.xlane.f32.xlu0 %v832
        %v834 = vpop.xlane.xlu0 %833
        %v835 = vsel %vm818, %v831, 0.0
        %836 = vadd.xlane.f32.xlu0 %v835
        %v837 = vpop.xlane.xlu0 %836
        %v838 = vmul.f32 %v834, %v825
        %v839 = vmul.f32 %v837, %v825
        %v840 = vadd.f32 %v838, 1e-05
        %v841 = vadd.f32 %v839, 1e-05
        %v842 = vrsqrt.pop %v840
        %v843 = vrsqrt.pop %v841
        %v844 = vmul.f32 %v828, %v842
        %v845 = vmul.f32 %v829, %v843
        %v846 = vld [vmem:[#allocation8] sm:$0x1]
        %v848 = vlaneseq
        %v849 = vshrl.u32 %v848, 7
        %v850 = vsub.s32 0, %v849
        %v851 = vrot.slane %v846, %v850
        %v853 = vmul.f32 %v844, %v851
        %v854 = vmul.f32 %v845, %v851
        %v855 = vld [vmem:[#allocation10] sm:$0x1]
        %v857 = vlaneseq
        %v858 = vshrl.u32 %v857, 7
        %v859 = vsub.s32 0, %v858
        %v860 = vrot.slane %v855, %v859
        %v862 = vadd.f32 %v853, %v860
        %v863 = vadd.f32 %v854, %v860
        %v864 = vld [vmem:[%s11] sm:$0xff]
        %v865 = vld [vmem:[%s11 + $0x8] sm:$0xff]
        %v866 = vld [vmem:[%s11 + $0x10] sm:$0xff]
        %v867 = vld [vmem:[%s11 + $0x18] sm:$0xff]
        %v868 = vld [vmem:[%s12] sm:$0x1]
        %v870 = vlaneseq
        %v871 = vshrl.u32 %v870, 7
        %v872 = vsub.s32 0, %v871
        %v873 = vrot.slane %v868, %v872
        %v876 = vsel %vm818, %v862, 0
        %v879 = vsel %vm818, %v863, 0
        %881 = vmatprep.subr.mxu0 0.0
        %882 = vmatpush1.msra.mxu0 %v864
        %883 = vmatprep.subr.mxu0 0.0
        %884 = vmatpush1.msra.mxu0 %v865
        %885 = vmatprep.subr.mxu0 0.0
        %886 = vmatpush1.msra.mxu0 %v866
        %887 = vmatprep.subr.mxu0 0.0
        %888 = vmatpush1.msra.mxu0 %v867
        %889 = vmatprep.subr.mxu0 0.0
        %890 = vmatpush1.msra.mxu0 0.0
        %891 = vmatprep.subr.mxu0 0.0
        %892 = vmatpush1.msra.mxu0 0.0
        %893 = vmatprep.subr.mxu0 0.0
        %894 = vmatpush1.msra.mxu0 0.0
        %895 = vmatprep.subr.mxu0 0.0
        %896 = vmatpush1.msra.mxu0 0.0
        %897 = vmatprep.subr.mxu0 0.0
        %898 = vmatpush1.msra.mxu0 0.0
        %899 = vmatprep.subr.mxu0 0.0
        %900 = vmatpush1.msra.mxu0 0.0
        %901 = vmatprep.subr.mxu0 0.0
        %902 = vmatpush1.msra.mxu0 0.0
        %903 = vmatprep.subr.mxu0 0.0
        %904 = vmatpush1.msra.mxu0 0.0
        %905 = vmatprep.subr.mxu0 0.0
        %906 = vmatpush1.msra.mxu0 0.0
        %907 = vmatprep.subr.mxu0 0.0
        %908 = vmatpush1.msra.mxu0 0.0
        %909 = vmatprep.subr.mxu0 0.0
        %910 = vmatpush1.msra.mxu0 0.0
        %911 = vmatprep.subr.mxu0 0.0
        %912 = vmatpush1.msra.mxu0 0.0
        %913 = vmatprep.subr.mxu0 0.0
        %914 = vmatpush1.msra.mxu0 0.0
        %915 = vmatprep.subr.mxu0 0.0
        %916 = vmatpush1.msra.mxu0 0.0
        %917 = vmatprep.subr.mxu0 0.0
        %918 = vmatpush1.msra.mxu0 0.0
        %919 = vmatprep.subr.mxu0 0.0
        %920 = vmatpush1.msra.mxu0 0.0
        %921 = vmatprep.subr.mxu0 0.0
        %922 = vmatpush1.msra.mxu0 0.0
        %923 = vmatprep.subr.mxu0 0.0
        %924 = vmatpush1.msra.mxu0 0.0
        %925 = vmatprep.subr.mxu0 0.0
        %926 = vmatpush1.msra.mxu0 0.0
        %927 = vmatprep.subr.mxu0 0.0
        %928 = vmatpush1.msra.mxu0 0.0
        %929 = vmatprep.subr.mxu0 0.0
        %930 = vmatpush1.msra.mxu0 0.0
        %931 = vmatprep.subr.mxu0 0.0
        %932 = vmatpush1.msra.mxu0 0.0
        %933 = vmatprep.subr.mxu0 0.0
        %934 = vmatpush1.msra.mxu0 0.0
        %935 = vmatprep.subr.mxu0 0.0
        %936 = vmatpush1.msra.mxu0 0.0
        %937 = vmatprep.subr.mxu0 0.0
        %938 = vmatpush1.msra.mxu0 0.0
        %939 = vmatprep.subr.mxu0 0.0
        %940 = vmatpush1.msra.mxu0 0.0
        %941 = vmatprep.subr.mxu0 0.0
        %942 = vmatpush1.msra.mxu0 0.0
        %943 = vmatprep.subr.mxu0 0.0
        %944 = vmatpush1.msra.mxu0 0.0
        %945 = vmatprep.mubr.f32.mxu0 0.0
        %946 = vmatmul.mubr.f32.gmra.mrb[0].mxu0 %v876
        %v947 = vpop.f32.mrb[0].mxu0
        %v948 = vadd.f32 %v873, %v947
        %v949 = vpop.f32.mrb[0].mxu0
        %950 = vmatprep.mubr.f32.mxu0 0.0
        %951 = vmatmul.mubr.f32.gmra.mrb[0].mxu0 %v879
        %v952 = vpop.f32.mrb[0].mxu0
        %v953 = vadd.f32 %v873, %v952
        %v954 = vpop.f32.mrb[0].mxu0
        %955 = vdwg.mxu0
        %956 = vst.msk [vmem:[%s728] sm:$0xff] %vm818, %v948
        %957 = vst.msk [vmem:[%s728 + $0x8] sm:$0xff] %vm818, %v953
        %v958 = vld [vmem:[#allocation5] sm:$0x7]
        %v959 = vlaneseq
        %v960 = vshrl.u32 %v959, 7
        %v961 = vsub.s32 0, %v960
        %v962 = vrot.slane %v958, %v961
        %v963 = vmul.f32 %v775, %v962
        %v964 = vmul.f32 %v772, %v962
        %v965 = vlaneseq
        %v966 = vshrl.u32 %v965, 7
        %v967 = vsub.s32 1, %v966
        %v968 = vrot.slane %v958, %v967
        %v969 = vmul.f32 %v763, %v968
        %v970 = vmul.f32 %v764, %v968
        %v971 = vadd.f32 %v963, %v969
        %v972 = vadd.f32 %v964, %v970
        %v973 = vlaneseq
        %v974 = vshrl.u32 %v973, 7
        %v975 = vsub.s32 2, %v974
        %v976 = vrot.slane %v958, %v975
        %v977 = vmul.f32 %v779, %v976
        %v978 = vmul.f32 %v782, %v976
        %v979 = vadd.f32 %v971, %v977
        %v980 = vadd.f32 %v972, %v978
        %v981 = vmul.f32 %v979, %v809
        %v982 = vmul.f32 %v980, %v814
        %v983 = vsel %vm818, %v981, 0.0
        %984 = vadd.xlane.f32.xlu0 %v983
        %v985 = vpop.xlane.xlu0 %984
        %v986 = vsel %vm818, %v982, 0.0
        %987 = vadd.xlane.f32.xlu0 %v986
        %v988 = vpop.xlane.xlu0 %987
        %v989 = vmul.f32 %v985, %v825
        %v990 = vmul.f32 %v988, %v825
        %v991 = vsub.f32 %v981, %v989
        %v992 = vsub.f32 %v982, %v990
        %v993 = vmul.f32 %v991, %v991
        %v994 = vmul.f32 %v992, %v992
        %v995 = vsel %vm818, %v993, 0.0
        %996 = vadd.xlane.f32.xlu0 %v995
        %v997 = vpop.xlane.xlu0 %996
        %v998 = vsel %vm818, %v994, 0.0
        %999 = vadd.xlane.f32.xlu0 %v998
        %v1000 = vpop.xlane.xlu0 %999
        %v1001 = vmul.f32 %v997, %v825
        %v1002 = vmul.f32 %v1000, %v825
        %v1003 = vadd.f32 %v1001, 1e-05
        %v1004 = vadd.f32 %v1002, 1e-05
        %v1005 = vrsqrt.pop %v1003
        %v1006 = vrsqrt.pop %v1004
        %v1007 = vmul.f32 %v991, %v1005
        %v1008 = vmul.f32 %v992, %v1006
        %v1009 = vld [vmem:[#allocation11] sm:$0x1]
        %v1011 = vlaneseq
        %v1012 = vshrl.u32 %v1011, 7
        %v1013 = vsub.s32 0, %v1012
        %v1014 = vrot.slane %v1009, %v1013
        %v1016 = vmul.f32 %v1007, %v1014
        %v1017 = vmul.f32 %v1008, %v1014
        %v1018 = vld [vmem:[#allocation13] sm:$0x1]
        %v1020 = vlaneseq
        %v1021 = vshrl.u32 %v1020, 7
        %v1022 = vsub.s32 0, %v1021
        %v1023 = vrot.slane %v1018, %v1022
        %v1025 = vadd.f32 %v1016, %v1023
        %v1026 = vadd.f32 %v1017, %v1023
        %v1027 = vld [vmem:[#allocation14] sm:$0xff]
        %v1028 = vld [vmem:[#allocation14 + $0x8] sm:$0xff]
        %v1029 = vld [vmem:[#allocation14 + $0x10] sm:$0xff]
        %v1030 = vld [vmem:[#allocation14 + $0x18] sm:$0xff]
        %v1031 = vld [vmem:[%s14] sm:$0x1]
        %v1033 = vlaneseq
        %v1034 = vshrl.u32 %v1033, 7
        %v1035 = vsub.s32 0, %v1034
        %v1036 = vrot.slane %v1031, %v1035
        %v1039 = vsel %vm818, %v1025, 0
        %v1042 = vsel %vm818, %v1026, 0
        %1044 = vmatprep.subr.mxu0 0.0
        %1045 = vmatpush1.msra.mxu0 %v1027
        %1046 = vmatprep.subr.mxu0 0.0
        %1047 = vmatpush1.msra.mxu0 %v1028
        %1048 = vmatprep.subr.mxu0 0.0
        %1049 = vmatpush1.msra.mxu0 %v1029
        %1050 = vmatprep.subr.mxu0 0.0
        %1051 = vmatpush1.msra.mxu0 %v1030
        %1052 = vmatprep.subr.mxu0 0.0
        %1053 = vmatpush1.msra.mxu0 0.0
        %1054 = vmatprep.subr.mxu0 0.0
        %1055 = vmatpush1.msra.mxu0 0.0
        %1056 = vmatprep.subr.mxu0 0.0
        %1057 = vmatpush1.msra.mxu0 0.0
        %1058 = vmatprep.subr.mxu0 0.0
        %1059 = vmatpush1.msra.mxu0 0.0
        %1060 = vmatprep.subr.mxu0 0.0
        %1061 = vmatpush1.msra.mxu0 0.0
        %1062 = vmatprep.subr.mxu0 0.0
        %1063 = vmatpush1.msra.mxu0 0.0
        %1064 = vmatprep.subr.mxu0 0.0
        %1065 = vmatpush1.msra.mxu0 0.0
        %1066 = vmatprep.subr.mxu0 0.0
        %1067 = vmatpush1.msra.mxu0 0.0
        %1068 = vmatprep.subr.mxu0 0.0
        %1069 = vmatpush1.msra.mxu0 0.0
        %1070 = vmatprep.subr.mxu0 0.0
        %1071 = vmatpush1.msra.mxu0 0.0
        %1072 = vmatprep.subr.mxu0 0.0
        %1073 = vmatpush1.msra.mxu0 0.0
        %1074 = vmatprep.subr.mxu0 0.0
        %1075 = vmatpush1.msra.mxu0 0.0
        %1076 = vmatprep.subr.mxu0 0.0
        %1077 = vmatpush1.msra.mxu0 0.0
        %1078 = vmatprep.subr.mxu0 0.0
        %1079 = vmatpush1.msra.mxu0 0.0
        %1080 = vmatprep.subr.mxu0 0.0
        %1081 = vmatpush1.msra.mxu0 0.0
        %1082 = vmatprep.subr.mxu0 0.0
        %1083 = vmatpush1.msra.mxu0 0.0
        %1084 = vmatprep.subr.mxu0 0.0
        %1085 = vmatpush1.msra.mxu0 0.0
        %1086 = vmatprep.subr.mxu0 0.0
        %1087 = vmatpush1.msra.mxu0 0.0
        %1088 = vmatprep.subr.mxu0 0.0
        %1089 = vmatpush1.msra.mxu0 0.0
        %1090 = vmatprep.subr.mxu0 0.0
        %1091 = vmatpush1.msra.mxu0 0.0
        %1092 = vmatprep.subr.mxu0 0.0
        %1093 = vmatpush1.msra.mxu0 0.0
        %1094 = vmatprep.subr.mxu0 0.0
        %1095 = vmatpush1.msra.mxu0 0.0
        %1096 = vmatprep.subr.mxu0 0.0
        %1097 = vmatpush1.msra.mxu0 0.0
        %1098 = vmatprep.subr.mxu0 0.0
        %1099 = vmatpush1.msra.mxu0 0.0
        %1100 = vmatprep.subr.mxu0 0.0
        %1101 = vmatpush1.msra.mxu0 0.0
        %1102 = vmatprep.subr.mxu0 0.0
        %1103 = vmatpush1.msra.mxu0 0.0
        %1104 = vmatprep.subr.mxu0 0.0
        %1105 = vmatpush1.msra.mxu0 0.0
        %1106 = vmatprep.subr.mxu0 0.0
        %1107 = vmatpush1.msra.mxu0 0.0
        %1108 = vmatprep.mubr.f32.mxu0 0.0
        %1109 = vmatmul.mubr.f32.gmra.mrb[0].mxu0 %v1039
        %v1110 = vpop.f32.mrb[0].mxu0
        %v1111 = vadd.f32 %v1036, %v1110
        %v1112 = vpop.f32.mrb[0].mxu0
        %1113 = vmatprep.mubr.f32.mxu0 0.0
        %1114 = vmatmul.mubr.f32.gmra.mrb[0].mxu0 %v1042
        %v1115 = vpop.f32.mrb[0].mxu0
        %v1116 = vadd.f32 %v1036, %v1115
        %v1117 = vpop.f32.mrb[0].mxu0
        %1118 = vdwg.mxu0
        %1119 = vst.msk [vmem:[%s757] sm:$0xff] %vm818, 0.0
        %1120 = vst.msk [vmem:[%s757 + $0x8] sm:$0xff] %vm818, 0.0
        %1121 = vst.msk [vmem:[%s757 + $0x10] sm:$0xff] %vm818, %v1111
        %1122 = vst.msk [vmem:[%s757 + $0x18] sm:$0xff] %vm818, %v1116
        %1123 = vst.msk [vmem:[%s757 + $0x20] sm:$0xff] %vm818, 0.0
        %1124 = vst.msk [vmem:[%s757 + $0x28] sm:$0xff] %vm818, 0.0
        %v1125 = vld [vmem:[#allocation7] sm:$0x7]
        %v1126 = vlaneseq
        %v1127 = vshrl.u32 %v1126, 7
        %v1128 = vsub.s32 0, %v1127
        %v1129 = vrot.slane %v1125, %v1128
        %v1130 = vmul.f32 %v775, %v1129
        %v1131 = vmul.f32 %v772, %v1129
        %v1132 = vlaneseq
        %v1133 = vshrl.u32 %v1132, 7
        %v1134 = vsub.s32 1, %v1133
        %v1135 = vrot.slane %v1125, %v1134
        %v1136 = vmul.f32 %v763, %v1135
        %v1137 = vmul.f32 %v764, %v1135
        %v1138 = vadd.f32 %v1130, %v1136
        %v1139 = vadd.f32 %v1131, %v1137
        %v1140 = vlaneseq
        %v1141 = vshrl.u32 %v1140, 7
        %v1142 = vsub.s32 2, %v1141
        %v1143 = vrot.slane %v1125, %v1142
        %v1144 = vmul.f32 %v779, %v1143
        %v1145 = vmul.f32 %v782, %v1143
        %v1146 = vadd.f32 %v1138, %v1144
        %v1147 = vadd.f32 %v1139, %v1145
        %v1148 = vmul.f32 %v1146, %v809
        %v1149 = vmul.f32 %v1147, %v814
        %v1150 = vsel %vm818, %v1148, 0.0
        %1151 = vadd.xlane.f32.xlu0 %v1150
        %v1152 = vpop.xlane.xlu0 %1151
        %v1153 = vsel %vm818, %v1149, 0.0
        %1154 = vadd.xlane.f32.xlu0 %v1153
        %v1155 = vpop.xlane.xlu0 %1154
        %v1156 = vmul.f32 %v1152, %v825
        %v1157 = vmul.f32 %v1155, %v825
        %v1158 = vsub.f32 %v1148, %v1156
        %v1159 = vsub.f32 %v1149, %v1157
        %v1160 = vmul.f32 %v1158, %v1158
        %v1161 = vmul.f32 %v1159, %v1159
        %v1162 = vsel %vm818, %v1160, 0.0
        %1163 = vadd.xlane.f32.xlu0 %v1162
        %v1164 = vpop.xlane.xlu0 %1163
        %v1165 = vsel %vm818, %v1161, 0.0
        %1166 = vadd.xlane.f32.xlu0 %v1165
        %v1167 = vpop.xlane.xlu0 %1166
        %v1168 = vmul.f32 %v1164, %v825
        %v1169 = vmul.f32 %v1167, %v825
        %v1170 = vadd.f32 %v1168, 1e-05
        %v1171 = vadd.f32 %v1169, 1e-05
        %v1172 = vrsqrt.pop %v1170
        %v1173 = vrsqrt.pop %v1171
        %v1174 = vmul.f32 %v1158, %v1172
        %v1175 = vmul.f32 %v1159, %v1173
        %v1176 = vld [vmem:[%s9] sm:$0x1]
        %v1178 = vlaneseq
        %v1179 = vshrl.u32 %v1178, 7
        %v1180 = vsub.s32 0, %v1179
        %v1181 = vrot.slane %v1176, %v1180
        %v1183 = vmul.f32 %v1174, %v1181
        %v1184 = vmul.f32 %v1175, %v1181
        %v1185 = vld [vmem:[%s10] sm:$0x1]
        %v1187 = vlaneseq
        %v1188 = vshrl.u32 %v1187, 7
        %v1189 = vsub.s32 0, %v1188
        %v1190 = vrot.slane %v1185, %v1189
        %v1192 = vadd.f32 %v1183, %v1190
        %v1193 = vadd.f32 %v1184, %v1190
        %v1194 = vld [vmem:[#allocation16] sm:$0xff]
        %v1195 = vld [vmem:[#allocation16 + $0x8] sm:$0xff]
        %v1196 = vld [vmem:[#allocation16 + $0x10] sm:$0xff]
        %v1197 = vld [vmem:[#allocation16 + $0x18] sm:$0xff]
        %v1198 = vld [vmem:[%s16] sm:$0x1]
        %v1200 = vlaneseq
        %v1201 = vshrl.u32 %v1200, 7
        %v1202 = vsub.s32 0, %v1201
        %v1203 = vrot.slane %v1198, %v1202
        %v1206 = vsel %vm818, %v1192, 0
        %v1209 = vsel %vm818, %v1193, 0
        %1211 = vmatprep.subr.mxu0 0.0
        %1212 = vmatpush1.msra.mxu0 %v1194
        %1213 = vmatprep.subr.mxu0 0.0
        %1214 = vmatpush1.msra.mxu0 %v1195
        %1215 = vmatprep.subr.mxu0 0.0
        %1216 = vmatpush1.msra.mxu0 %v1196
        %1217 = vmatprep.subr.mxu0 0.0
        %1218 = vmatpush1.msra.mxu0 %v1197
        %1219 = vmatprep.subr.mxu0 0.0
        %1220 = vmatpush1.msra.mxu0 0.0
        %1221 = vmatprep.subr.mxu0 0.0
        %1222 = vmatpush1.msra.mxu0 0.0
        %1223 = vmatprep.subr.mxu0 0.0
        %1224 = vmatpush1.msra.mxu0 0.0
        %1225 = vmatprep.subr.mxu0 0.0
        %1226 = vmatpush1.msra.mxu0 0.0
        %1227 = vmatprep.subr.mxu0 0.0
        %1228 = vmatpush1.msra.mxu0 0.0
        %1229 = vmatprep.subr.mxu0 0.0
        %1230 = vmatpush1.msra.mxu0 0.0
        %1231 = vmatprep.subr.mxu0 0.0
        %1232 = vmatpush1.msra.mxu0 0.0
        %1233 = vmatprep.subr.mxu0 0.0
        %1234 = vmatpush1.msra.mxu0 0.0
        %1235 = vmatprep.subr.mxu0 0.0
        %1236 = vmatpush1.msra.mxu0 0.0
        %1237 = vmatprep.subr.mxu0 0.0
        %1238 = vmatpush1.msra.mxu0 0.0
        %1239 = vmatprep.subr.mxu0 0.0
        %1240 = vmatpush1.msra.mxu0 0.0
        %1241 = vmatprep.subr.mxu0 0.0
        %1242 = vmatpush1.msra.mxu0 0.0
        %1243 = vmatprep.subr.mxu0 0.0
        %1244 = vmatpush1.msra.mxu0 0.0
        %1245 = vmatprep.subr.mxu0 0.0
        %1246 = vmatpush1.msra.mxu0 0.0
        %1247 = vmatprep.subr.mxu0 0.0
        %1248 = vmatpush1.msra.mxu0 0.0
        %1249 = vmatprep.subr.mxu0 0.0
        %1250 = vmatpush1.msra.mxu0 0.0
        %1251 = vmatprep.subr.mxu0 0.0
        %1252 = vmatpush1.msra.mxu0 0.0
        %1253 = vmatprep.subr.mxu0 0.0
        %1254 = vmatpush1.msra.mxu0 0.0
        %1255 = vmatprep.subr.mxu0 0.0
        %1256 = vmatpush1.msra.mxu0 0.0
        %1257 = vmatprep.subr.mxu0 0.0
        %1258 = vmatpush1.msra.mxu0 0.0
        %1259 = vmatprep.subr.mxu0 0.0
        %1260 = vmatpush1.msra.mxu0 0.0
        %1261 = vmatprep.subr.mxu0 0.0
        %1262 = vmatpush1.msra.mxu0 0.0
        %1263 = vmatprep.subr.mxu0 0.0
        %1264 = vmatpush1.msra.mxu0 0.0
        %1265 = vmatprep.subr.mxu0 0.0
        %1266 = vmatpush1.msra.mxu0 0.0
        %1267 = vmatprep.subr.mxu0 0.0
        %1268 = vmatpush1.msra.mxu0 0.0
        %1269 = vmatprep.subr.mxu0 0.0
        %1270 = vmatpush1.msra.mxu0 0.0
        %1271 = vmatprep.subr.mxu0 0.0
        %1272 = vmatpush1.msra.mxu0 0.0
        %1273 = vmatprep.subr.mxu0 0.0
        %1274 = vmatpush1.msra.mxu0 0.0
        %1275 = vmatprep.mubr.f32.mxu0 0.0
        %1276 = vmatmul.mubr.f32.gmra.mrb[0].mxu0 %v1206
        %v1277 = vpop.f32.mrb[0].mxu0
        %v1278 = vadd.f32 %v1203, %v1277
        %v1279 = vpop.f32.mrb[0].mxu0
        %1280 = vmatprep.mubr.f32.mxu0 0.0
        %1281 = vmatmul.mubr.f32.gmra.mrb[0].mxu0 %v1209
        %v1282 = vpop.f32.mrb[0].mxu0
        %v1283 = vadd.f32 %v1203, %v1282
        %v1284 = vpop.f32.mrb[0].mxu0
        %1285 = vdwg.mxu0
        %1286 = vst.msk [vmem:[%s762] sm:$0xff] %vm818, 0.0
        %1287 = vst.msk [vmem:[%s762 + $0x8] sm:$0xff] %vm818, 0.0
        %1288 = vst.msk [vmem:[%s762 + $0x10] sm:$0xff] %vm818, %v1278
        %1289 = vst.msk [vmem:[%s762 + $0x18] sm:$0xff] %vm818, %v1283
        %1290 = vst.msk [vmem:[%s762 + $0x20] sm:$0xff] %vm818, 0.0
        %1291 = vst.msk [vmem:[%s762 + $0x28] sm:$0xff] %vm818, 0.0
        %s1292 = sand.u32 %s414, 1
        %s1293 = scalar_lea.sflag [#allocation4], %s1292
        %s1294 = sand.u32 %s414, 1
        %s1295 = smul.addr %s1294, 16
        %s1296 = scalar_lea.vmem [#allocation17], %s1295
        %p1297 = scmp.lt.s32.totalorder %s39, 1
        %s1298 = scalar_select %p1297, %s39, 1
        %s1299 = smul.addr %s1298, 6
        %s1300 = smul.addr %s1299, 8
        %s1301 = scalar_lea.vmem %s18, %s1300
        %p1302 = scmp.lt.s32.totalorder %s39, 1
        %s1303 = scalar_select %p1302, %s39, 1
        %s1304 = smul.addr %s1303, 6
        %s1305 = smul.addr %s1304, 8
        %s1306 = scalar_lea.vmem %s19, %s1305
        // Predicated region
        $region125: #{tpu_custom_call.1} parent=87 // pred_check
          %p1307 = pneg %p424
        $region126: #{tpu_custom_call.1} parent=87 // pred_check_branch
          %1309 = sbr.rel (%p1307) target = $region128
        $region127: #{tpu_custom_call.1} parent=87 // pred_region
          %s1311 = ssub.s32 256, 256
          %1312 = vsyncadd %s1293, %s1311
          %s1313 = smul.addr %s39, 2
          %s1314 = smul.addr %s1313, 128
          %s1315 = scalar_lea.hbm %s17, %s1314
          %s1316 = sshll.u32 %s1296, 4
          %s1317 = int_to_ptr.vmem [resolvable:$true] %s1316
          %1322 = dma.vmem_to_hbm [thread:$0]  %s1317, 256, %s1315, %s1293, 128, 128, 8
        $region128: #{tpu_custom_call.1} parent=87 // pred_fallthru
          _
        // Predicated region
        $region129: #{tpu_custom_call.1} parent=87 // pred_check
          %p1323 = pneg %p450
        $region130: #{tpu_custom_call.1} parent=87 // pred_check_branch
          %1325 = sbr.rel (%p1323) target = $region132
        $region131: #{tpu_custom_call.1} parent=87 // pred_region
          _
        $region132: #{tpu_custom_call.1} parent=87 // pred_fallthru
          _
        // Predicated region
        $region133: #{tpu_custom_call.1} parent=87 // pred_check
          %p1326 = pneg %p476
        $region134: #{tpu_custom_call.1} parent=87 // pred_check_branch
          %1328 = sbr.rel (%p1326) target = $region136
        $region135: #{tpu_custom_call.1} parent=87 // pred_region
          _
        $region136: #{tpu_custom_call.1} parent=87 // pred_fallthru
          _
      $region88: #{tpu_custom_call.1} parent=5 // pred_fallthru
        _
      %p1329 = scmp.le.s32.totalorder 2, %s34
      // Predicated region
      $region137: #{tpu_custom_call.1} parent=5 // pred_check
        %p1330 = pneg %p1329
      $region138: #{tpu_custom_call.1} parent=5 // pred_check_branch
        %1332 = sbr.rel (%p1330) target = $region140
      $region139: #{tpu_custom_call.1} parent=5 // pred_region
        %s1333 = ssub.s32 %s34, 2
        // Predicated region
        $region141: #{tpu_custom_call.1} parent=139 // pred_check
          %p1334 = pneg %p430
        $region142: #{tpu_custom_call.1} parent=139 // pred_check_branch
          %1336 = sbr.rel (%p1334) target = $region144
        $region143: #{tpu_custom_call.1} parent=139 // pred_region
          %s1337 = sand.u32 %s415, 1
          %s1338 = scalar_lea.sflag [#allocation4], %s1337
          %s1339 = sand.u32 %s415, 1
          %s1340 = smul.addr %s1339, 16
          %s1341 = scalar_lea.vmem [#allocation17], %s1340
          %1342 = dma.done %s1338, 256
        $region144: #{tpu_custom_call.1} parent=139 // pred_fallthru
          _
        // Predicated region
        $region145: #{tpu_custom_call.1} parent=139 // pred_check
          %p1343 = pneg %p456
        $region146: #{tpu_custom_call.1} parent=139 // pred_check_branch
          %1345 = sbr.rel (%p1343) target = $region148
        $region147: #{tpu_custom_call.1} parent=139 // pred_region
          %p1346 = scmp.lt.s32.totalorder %s40, 1
          %s1347 = scalar_select %p1346, %s40, 1
          %s1348 = smul.addr %s1347, 6
          %s1349 = smul.addr %s1348, 8
          %s1350 = scalar_lea.vmem %s18, %s1349
        $region148: #{tpu_custom_call.1} parent=139 // pred_fallthru
          _
        // Predicated region
        $region149: #{tpu_custom_call.1} parent=139 // pred_check
          %p1351 = pneg %p482
        $region150: #{tpu_custom_call.1} parent=139 // pred_check_branch
          %1353 = sbr.rel (%p1351) target = $region152
        $region151: #{tpu_custom_call.1} parent=139 // pred_region
          %p1354 = scmp.lt.s32.totalorder %s40, 1
          %s1355 = scalar_select %p1354, %s40, 1
          %s1356 = smul.addr %s1355, 6
          %s1357 = smul.addr %s1356, 8
          %s1358 = scalar_lea.vmem %s19, %s1357
        $region152: #{tpu_custom_call.1} parent=139 // pred_fallthru
          _
      $region140: #{tpu_custom_call.1} parent=5 // pred_fallthru
        _
    $region6: #{tpu_custom_call.1} parent=1 // loop_footer
      %s38 = sadd.s32 1, %s34
    $region7: #{tpu_custom_call.1} parent=1 // loop_footer_branch
      %33 = sbr.rel target = $region3
    $region8: #{tpu_custom_call.1} parent=1 // loop_exit
      _
    %1359 = vsyncpa [#allocation3], 1
    %s1360 = scalar_lea.sflag [#allocation3], 1
    %1361 = vsyncpa %s1360, 1
    %1362 = vsyncpa [#allocation6], 1
    %1363 = vsyncpa [#allocation9], 1
    %1364 = vsyncpa [#allocation12], 1
    %1365 = vsyncpa [#allocation15], 1
    %1366 = vsyncpa [#allocation4], 1
    %s1367 = scalar_lea.sflag [#allocation4], 1
    %1368 = vsyncpa %s1367, 1

</llo_original>
